<compile_context>
chip_gen: v6e
topology: v6e:2x2x1
jax: 0.10.0
libtpu: 0.0.40
codegen_flags: <defaults>
</compile_context>

<pallas_src>
import math
from functools import partial

import jax
import jax.numpy as jnp
from jax.experimental import pallas as pl
from jax.experimental.pallas import tpu as pltpu


# ----------------------------------------------------------------------------
# Model geometry (PyTorch Model4 with 32x32x3 input; lazy f1 resolves to 400).
# ----------------------------------------------------------------------------
H_IN, W_IN, C_IN = 32, 32, 3
K = 5
C1, C2 = 6, 16
OH1, OW1 = H_IN - K + 1, W_IN - K + 1          # 28, 28
HP1, WP1 = OH1 // 2, OW1 // 2                  # 14, 14
OH2, OW2 = HP1 - K + 1, WP1 - K + 1            # 10, 10
HP2, WP2 = OH2 // 2, OW2 // 2                  # 5, 5
FLAT = HP2 * WP2 * C2                          # 400
F1, F2 = 120, 84
LG = 128                                       # lane group = one vreg width
COMPUTE_DTYPE = jnp.bfloat16                   # MXU operand dtype (f32 accum)


def _round_up(x, m):
    return ((x + m - 1) // m) * m


# ----------------------------------------------------------------------------
# Fused forward kernel: B_TILE images per grid step.
# Row layouts (within a step, bt = batch tile):
#   lhs1 rows : (du, pr, a, img)   -> image row 4a+2pr+du   (28*bt rows)
#   p1   rows : (pr, a, img)       -> pooled conv1 row 2a+pr (14*bt rows)
#   p2   rows : (j2, img)          -> pooled conv2 row j2    ( 5*bt rows)
# Lane layouts: conv outputs are (dv, q, co) with each dv group padded to 128,
# so column pooling is max of the two 128-lane halves.
# ----------------------------------------------------------------------------
def _fused_kernel(lhs1_ref, bw1_ref, bw2_ref, wf1_ref, wf2_ref, wf3_ref,
                  b_ref, o_ref):
    f32 = jnp.float32
    cdt = COMPUTE_DTYPE
    bt = o_ref.shape[0]                                   # batch tile (static)

    # ---- conv1 + bias + ReLU + 2x2 maxpool : one MXU matmul ---------------
    y1 = jnp.dot(lhs1_ref[...], bw1_ref[...],
                 preferred_element_type=f32)              # (28bt, 256)
    m1 = jnp.maximum(y1[:14 * bt], y1[14 * bt:])          # row pool (du)
    m1 = jnp.maximum(m1[:, :LG], m1[:, LG:])              # col pool (dv) -> (14bt,128)
    # relu(max(.)+b) == maxpool(relu(conv+b))  (bias const per 2x2 window)
    p1 = jnp.maximum(m1 + b_ref[0:1, :], 0.0).astype(cdt)  # (14bt,128)

    # ---- conv2 + bias + ReLU + 2x2 maxpool : 10 accumulated MXU matmuls ---
    # Every LHS slice starts at a multiple of bt (>=8 sublanes); every bw2
    # block starts at a multiple of 128 rows.
    def conv2_half(du):
        acc = None
        for kh in range(K):
            par = (du + kh) % 2
            off = (du + kh) // 2
            start = (par * 7 + off) * bt
            piece = p1[start:start + 5 * bt, :]            # (5bt, 128)
            blk = bw2_ref[kh * LG:(kh + 1) * LG, :]        # (128, 256)
            d = jnp.dot(piece, blk, preferred_element_type=f32)
            acc = d if acc is None else acc + d
        return acc                                         # (5bt, 256)

    m2 = jnp.maximum(conv2_half(0), conv2_half(1))         # row pool (du)
    m2 = jnp.maximum(m2[:, :LG], m2[:, LG:])               # col pool (dv) -> (5bt,128)
    p2 = jnp.maximum(m2 + b_ref[1:2, :], 0.0).astype(cdt)  # (5bt,128)

    # ---- flatten folded into wf1 row blocks + 3-layer MLP ------------------
    h1 = None
    for j2 in range(HP2):
        d = jnp.dot(p2[j2 * bt:(j2 + 1) * bt, :],
                    wf1_ref[j2 * LG:(j2 + 1) * LG, :],
                    preferred_element_type=f32)            # (bt, 128)
        h1 = d if h1 is None else h1 + d
    h1 = jnp.maximum(h1 + b_ref[2:3, :], 0.0).astype(cdt)  # (bt, 128)

    h2 = jnp.dot(h1, wf2_ref[...], preferred_element_type=f32)
    h2 = jnp.maximum(h2 + b_ref[3:4, :], 0.0).astype(cdt)  # (bt, 128)

    o_ref[...] = jnp.dot(h2, wf3_ref[...],
                         preferred_element_type=f32) + b_ref[4:5, :]


# ----------------------------------------------------------------------------
# Wrapper-side (plain JAX, same jit) weight / input transforms.
# ----------------------------------------------------------------------------
def _banded_pool_weight(w_hwio, w_in, row_pad, dtype):
    """(K,K,Cin,Cout) HWIO conv weight -> banded, pool-parity, 128-lane-padded
    matmul weight.

    Rows: kh*row_pad + v*Cin + ci   (v = input column; per-kh block padded)
    Cols: dv*128    + q*Cout + co   (output col j = 2q+dv; per-dv group padded)
    Entry = w[kh, v-(2q+dv), ci, co] inside the band, else 0.
    """
    kk, _, cin, cout = w_hwio.shape
    ow = w_in - kk + 1
    qp = ow // 2
    big = jnp.zeros((kk, 2, qp, w_in, cin, cout), jnp.float32)
    for dv in range(2):
        for q in range(qp):
            j = 2 * q + dv
            big = big.at[:, dv, q, j:j + kk, :, :].set(w_hwio.astype(jnp.float32))
    big = jnp.transpose(big, (0, 3, 4, 1, 2, 5))           # (kh, v, ci, dv, q, co)
    big = big.reshape(kk, w_in * cin, 2, qp * cout)
    big = jnp.pad(big, ((0, 0), (0, row_pad - w_in * cin),
                        (0, 0), (0, LG - qp * cout)))
    return big.reshape(kk * row_pad, 2 * LG).astype(dtype)


def _conv1_lhs(x_nhwc, bt, dtype):
    """Build batched conv1 im2row LHS: (n_steps * 28*bt, 480), bf16.

    Within a batch tile, row (du, pr, a, img) holds image row 4a+2pr+du of
    image `img`; lanes are (kh, v, ci) = that row and the next 4 rows, so
    the vertical conv taps are a lane offset and 2x2 row pooling is a
    contiguous half split at a sublane-aligned boundary (bt % 8 == 0).
    """
    n = x_nhwc.shape[0]
    ns = n // bt
    x2d = x_nhwc.astype(dtype).reshape(n, H_IN, W_IN * C_IN)     # (N, 32, 96)
    du = jnp.arange(2).reshape(2, 1, 1, 1)
    pr = jnp.arange(2).reshape(1, 2, 1, 1)
    a = jnp.arange(HP1 // 2).reshape(1, 1, HP1 // 2, 1)
    kh = jnp.arange(K).reshape(1, 1, 1, K)
    ridx = 4 * a + 2 * pr + du + kh                               # (2,2,7,5)
    g = x2d[:, ridx, :]                                           # (N,2,2,7,5,96)
    g = g.reshape(ns, bt, 2, 2, HP1 // 2, K, W_IN * C_IN)
    g = jnp.transpose(g, (0, 2, 3, 4, 1, 5, 6))                   # (ns,du,pr,a,img,kh,96)
    return g.reshape(ns * 2 * HP1 * bt, K * W_IN * C_IN)          # (ns*28bt, 480)


def _f1_weight(w_f1, dtype):
    """Fold the NCHW flatten into wf1: 5 row blocks of 128 (lane order q*16+c,
    rows 80..127 zero), output dim padded 120 -> 128.  Shape (640, 128)."""
    w = w_f1.reshape(C2, HP2, WP2, F1)                   # rows were c*25+p*5+q
    w = jnp.transpose(w, (1, 2, 0, 3))                   # (p, q, c, out)
    w = w.reshape(HP2, WP2 * C2, F1)
    w = jnp.pad(w, ((0, 0), (0, LG - WP2 * C2), (0, LG - F1)))
    return w.reshape(HP2 * LG, LG).astype(dtype)


def _bias_stack(p):
    """Pack all biases into one (8,128) f32 operand (one vreg)."""
    rows = jnp.zeros((8, LG), jnp.float32)
    b1 = jnp.tile(p["b_conv1"].reshape(1, C1), (1, WP1))[0]     # (84,) q-major
    b2 = jnp.tile(p["b_conv2"].reshape(1, C2), (1, WP2))[0]     # (80,) q-major
    rows = rows.at[0, :WP1 * C1].set(b1)
    rows = rows.at[1, :WP2 * C2].set(b2)
    rows = rows.at[2, :F1].set(p["b_f1"].reshape(-1))
    rows = rows.at[3, :F2].set(p["b_f2"].reshape(-1))
    rows = rows.at[4, :p["b_f3"].size].set(p["b_f3"].reshape(-1))
    return rows


@partial(jax.jit, static_argnames=("b_tile",))
def model4_forward(x_nchw, params, b_tile=32):
    n = x_nchw.shape[0]
    num_classes = params["w_f3"].shape[1]
    assert num_classes <= LG  # TODO(synk): generalize output lane padding if >128 classes
    out_lanes = LG

    # Batch tile: multiple of 8 for sublane alignment; keep small batches tight.
    bt = _round_up(min(b_tile, _round_up(n, 8)), 8)
    n_pad = _round_up(n, bt)
    ns = n_pad // bt

    x = jnp.transpose(x_nchw, (0, 2, 3, 1)).astype(jnp.float32)   # NCHW -> NHWC
    if n_pad != n:
        x = jnp.pad(x, ((0, n_pad - n), (0, 0), (0, 0), (0, 0)))

    cdt = COMPUTE_DTYPE
    lhs1 = _conv1_lhs(x, bt, cdt)                                         # (ns*28bt, 480)
    bw1 = _banded_pool_weight(params["w_conv1"], W_IN, W_IN * C_IN, cdt)  # (480, 256)
    bw2 = _banded_pool_weight(params["w_conv2"], WP1, LG, cdt)            # (640, 256)
    wf1 = _f1_weight(params["w_f1"], cdt)                                 # (640, 128)
    wf2 = jnp.pad(params["w_f2"], ((0, LG - F1), (0, LG - F2))).astype(cdt)      # (128,128)
    wf3 = jnp.pad(params["w_f3"],
                  ((0, LG - F2), (0, out_lanes - num_classes))).astype(cdt)      # (128,128)
    biases = _bias_stack(params)                                          # (8, 128) f32

    rows_per_step = 2 * HP1 * bt

    def const_spec(arr):
        return pl.BlockSpec(arr.shape, lambda i: (0, 0))

    out = pl.pallas_call(
        _fused_kernel,
        out_shape=jax.ShapeDtypeStruct((n_pad, out_lanes), jnp.float32),
        grid=(ns,),
        in_specs=[pl.BlockSpec((rows_per_step, K * W_IN * C_IN), lambda i: (i, 0)),
                  const_spec(bw1), const_spec(bw2), const_spec(wf1),
                  const_spec(wf2), const_spec(wf3), const_spec(biases)],
        out_specs=pl.BlockSpec((bt, out_lanes), lambda i: (i, 0)),
        compiler_params=pltpu.CompilerParams(
            dimension_semantics=("parallel",)),
    )(lhs1, bw1, bw2, wf1, wf2, wf3, biases)

    return out[:n, :num_classes]


# ----------------------------------------------------------------------------
# Parameters (deterministic, PyTorch-like uniform init).  f1 is lazily built
# in PyTorch; for a 32x32x3 input the flattened size is 16*5*5 = 400.
# ----------------------------------------------------------------------------
def init_params(key, num_classes=10):
    ks = jax.random.split(key, 10)

    def uni(k, shape, fan_in):
        bound = 1.0 / math.sqrt(fan_in)
        return jax.random.uniform(k, shape, jnp.float32, -bound, bound)

    return dict(
        w_conv1=uni(ks[0], (5, 5, 3, 6), 5 * 5 * 3),     # HWIO
        b_conv1=uni(ks[1], (1, 6), 5 * 5 * 3),
        w_conv2=uni(ks[2], (5, 5, 6, 16), 5 * 5 * 6),
        b_conv2=uni(ks[3], (1, 16), 5 * 5 * 6),
        w_f1=uni(ks[4], (FLAT, 120), FLAT),              # rows in NCHW-flatten order
        b_f1=uni(ks[5], (1, 120), FLAT),
        w_f2=uni(ks[6], (120, 84), 120),
        b_f2=uni(ks[7], (1, 84), 120),
        w_f3=uni(ks[8], (84, num_classes), 84),
        b_f3=uni(ks[9], (1, num_classes), 84),
    )


# ----------------------------------------------------------------------------
# Pure-JAX f32 reference for validation.
# ----------------------------------------------------------------------------
def reference_forward(x_nchw, p):
    x = jnp.transpose(x_nchw, (0, 2, 3, 1))
    hp = jax.lax.Precision.HIGHEST

    def conv_block(x, w, b):
        y = jax.lax.conv_general_dilated(
            x, w, window_strides=(1, 1), padding="VALID",
            dimension_numbers=("NHWC", "HWIO", "NHWC"), precision=hp)
        y = jnp.maximum(y + b.reshape(1, 1, 1, -1), 0.0)
        return jax.lax.reduce_window(y, -jnp.inf, jax.lax.max,
                                     (1, 2, 2, 1), (1, 2, 2, 1), "VALID")

    h = conv_block(x, p["w_conv1"], p["b_conv1"])
    h = conv_block(h, p["w_conv2"], p["b_conv2"])
    flat = jnp.transpose(h, (0, 3, 1, 2)).reshape(h.shape[0], -1)   # NCHW flatten
    h = jnp.maximum(jnp.dot(flat, p["w_f1"], precision=hp) + p["b_f1"], 0.0)
    h = jnp.maximum(jnp.dot(h, p["w_f2"], precision=hp) + p["b_f2"], 0.0)
    return jnp.dot(h, p["w_f3"], precision=hp) + p["b_f3"]


if __name__ == "__main__":
    key = jax.random.PRNGKey(0)
    kx, kp = jax.random.split(key)
    x = jax.random.normal(kx, (8, 3, 32, 32), jnp.float32)   # NCHW, like PyTorch
    params = init_params(kp, num_classes=10)

    out = jax.block_until_ready(model4_forward(x, params))
    assert out.shape == (8, 10), out.shape

    ref = jax.block_until_ready(reference_forward(x, params))
    # bf16 MXU operands with f32 accumulation -> a few 1e-3 of absolute error.
    assert jnp.allclose(out, ref, atol=3e-2, rtol=3e-2), (
        float(jnp.max(jnp.abs(out - ref))))

    print("KERNEL_OK")
</pallas_src>

<mosaic_0001>
module attributes {stable_mosaic.version = 11 : i64} {
  func.func @_fused_kernel(%arg0: i32, %arg1: memref<224x480xbf16, #tpu.memory_space<vmem>>, %arg2: memref<480x256xbf16, #tpu.memory_space<vmem>>, %arg3: memref<640x256xbf16, #tpu.memory_space<vmem>>, %arg4: memref<640x128xbf16, #tpu.memory_space<vmem>>, %arg5: memref<128x128xbf16, #tpu.memory_space<vmem>>, %arg6: memref<128x128xbf16, #tpu.memory_space<vmem>>, %arg7: memref<8x128xf32, #tpu.memory_space<vmem>>, %arg8: memref<8x128xf32, #tpu.memory_space<vmem>>) attributes {dimension_semantics = [#tpu.dimension_semantics<parallel>], iteration_bounds = array<i64: 1>, scalar_prefetch = 0 : i64, scratch_operands = 0 : i64, tpu.core_type = #tpu.core_type<tc>, window_params = [{transform_indices = @transform_0, window_bounds = array<i64: 224, 480>}, {pipeline_mode = #tpu.pipeline_mode<synchronous>, transform_indices = @transform_1, window_bounds = array<i64: 480, 256>}, {pipeline_mode = #tpu.pipeline_mode<synchronous>, transform_indices = @transform_2, window_bounds = array<i64: 640, 256>}, {pipeline_mode = #tpu.pipeline_mode<synchronous>, transform_indices = @transform_3, window_bounds = array<i64: 640, 128>}, {pipeline_mode = #tpu.pipeline_mode<synchronous>, transform_indices = @transform_4, window_bounds = array<i64: 128, 128>}, {pipeline_mode = #tpu.pipeline_mode<synchronous>, transform_indices = @transform_5, window_bounds = array<i64: 128, 128>}, {pipeline_mode = #tpu.pipeline_mode<synchronous>, transform_indices = @transform_6, window_bounds = array<i64: 8, 128>}, {transform_indices = @transform_7, window_bounds = array<i64: 8, 128>}]} {
    %c0 = arith.constant 0 : index
    %c0_0 = arith.constant 0 : index
    %0 = vector.load %arg1[%c0, %c0_0] : memref<224x480xbf16, #tpu.memory_space<vmem>>, vector<224x480xbf16>
    %c0_1 = arith.constant 0 : index
    %c0_2 = arith.constant 0 : index
    %1 = vector.load %arg2[%c0_1, %c0_2] : memref<480x256xbf16, #tpu.memory_space<vmem>>, vector<480x256xbf16>
    %cst = arith.constant dense<0.000000e+00> : vector<224x256xf32>
    %2 = tpu.matmul %0, %1, %cst {dimension_numbers = #tpu.dot_dimension_numbers<[1], [0], [0], [1], [0, 0, 1, 1], [], []>} : vector<224x480xbf16>, vector<480x256xbf16>, vector<224x256xf32> -> vector<224x256xf32>
    %3 = vector.extract_strided_slice %2 {offsets = [0, 0], sizes = [112, 256], strides = [1, 1]} : vector<224x256xf32> to vector<112x256xf32>
    %4 = vector.extract_strided_slice %2 {offsets = [112, 0], sizes = [112, 256], strides = [1, 1]} : vector<224x256xf32> to vector<112x256xf32>
    %5 = arith.maximumf %3, %4 : vector<112x256xf32>
    %6 = vector.extract_strided_slice %5 {offsets = [0, 0], sizes = [112, 128], strides = [1, 1]} : vector<112x256xf32> to vector<112x128xf32>
    %7 = vector.extract_strided_slice %5 {offsets = [0, 128], sizes = [112, 128], strides = [1, 1]} : vector<112x256xf32> to vector<112x128xf32>
    %8 = arith.maximumf %6, %7 : vector<112x128xf32>
    %c0_3 = arith.constant 0 : index
    %c0_4 = arith.constant 0 : index
    %9 = vector.load %arg7[%c0_3, %c0_4] : memref<8x128xf32, #tpu.memory_space<vmem>>, vector<1x128xf32>
    %10 = vector.broadcast %9 : vector<1x128xf32> to vector<112x128xf32>
    %11 = arith.addf %8, %10 : vector<112x128xf32>
    %cst_5 = arith.constant 0.000000e+00 : f32
    %12 = vector.broadcast %cst_5 : f32 to vector<112x128xf32>
    %13 = arith.maximumf %11, %12 : vector<112x128xf32>
    %14 = arith.truncf %13 : vector<112x128xf32> to vector<112x128xbf16>
    %15 = vector.extract_strided_slice %14 {offsets = [0, 0], sizes = [40, 128], strides = [1, 1]} : vector<112x128xbf16> to vector<40x128xbf16>
    %c0_6 = arith.constant 0 : index
    %c0_7 = arith.constant 0 : index
    %16 = vector.load %arg3[%c0_6, %c0_7] : memref<640x256xbf16, #tpu.memory_space<vmem>>, vector<128x256xbf16>
    %cst_8 = arith.constant dense<0.000000e+00> : vector<40x256xf32>
    %17 = tpu.matmul %15, %16, %cst_8 {dimension_numbers = #tpu.dot_dimension_numbers<[1], [0], [0], [1], [0, 0, 1, 1], [], []>} : vector<40x128xbf16>, vector<128x256xbf16>, vector<40x256xf32> -> vector<40x256xf32>
    %18 = vector.extract_strided_slice %14 {offsets = [56, 0], sizes = [40, 128], strides = [1, 1]} : vector<112x128xbf16> to vector<40x128xbf16>
    %c128 = arith.constant 128 : index
    %c0_9 = arith.constant 0 : index
    %19 = vector.load %arg3[%c128, %c0_9] : memref<640x256xbf16, #tpu.memory_space<vmem>>, vector<128x256xbf16>
    %cst_10 = arith.constant dense<0.000000e+00> : vector<40x256xf32>
    %20 = tpu.matmul %18, %19, %cst_10 {dimension_numbers = #tpu.dot_dimension_numbers<[1], [0], [0], [1], [0, 0, 1, 1], [], []>} : vector<40x128xbf16>, vector<128x256xbf16>, vector<40x256xf32> -> vector<40x256xf32>
    %21 = arith.addf %17, %20 : vector<40x256xf32>
    %22 = vector.extract_strided_slice %14 {offsets = [8, 0], sizes = [40, 128], strides = [1, 1]} : vector<112x128xbf16> to vector<40x128xbf16>
    %c256 = arith.constant 256 : index
    %c0_11 = arith.constant 0 : index
    %23 = vector.load %arg3[%c256, %c0_11] : memref<640x256xbf16, #tpu.memory_space<vmem>>, vector<128x256xbf16>
    %cst_12 = arith.constant dense<0.000000e+00> : vector<40x256xf32>
    %24 = tpu.matmul %22, %23, %cst_12 {dimension_numbers = #tpu.dot_dimension_numbers<[1], [0], [0], [1], [0, 0, 1, 1], [], []>} : vector<40x128xbf16>, vector<128x256xbf16>, vector<40x256xf32> -> vector<40x256xf32>
    %25 = arith.addf %21, %24 : vector<40x256xf32>
    %26 = vector.extract_strided_slice %14 {offsets = [64, 0], sizes = [40, 128], strides = [1, 1]} : vector<112x128xbf16> to vector<40x128xbf16>
    %c384 = arith.constant 384 : index
    %c0_13 = arith.constant 0 : index
    %27 = vector.load %arg3[%c384, %c0_13] : memref<640x256xbf16, #tpu.memory_space<vmem>>, vector<128x256xbf16>
    %cst_14 = arith.constant dense<0.000000e+00> : vector<40x256xf32>
    %28 = tpu.matmul %26, %27, %cst_14 {dimension_numbers = #tpu.dot_dimension_numbers<[1], [0], [0], [1], [0, 0, 1, 1], [], []>} : vector<40x128xbf16>, vector<128x256xbf16>, vector<40x256xf32> -> vector<40x256xf32>
    %29 = arith.addf %25, %28 : vector<40x256xf32>
    %30 = vector.extract_strided_slice %14 {offsets = [16, 0], sizes = [40, 128], strides = [1, 1]} : vector<112x128xbf16> to vector<40x128xbf16>
    %c512 = arith.constant 512 : index
    %c0_15 = arith.constant 0 : index
    %31 = vector.load %arg3[%c512, %c0_15] : memref<640x256xbf16, #tpu.memory_space<vmem>>, vector<128x256xbf16>
    %cst_16 = arith.constant dense<0.000000e+00> : vector<40x256xf32>
    %32 = tpu.matmul %30, %31, %cst_16 {dimension_numbers = #tpu.dot_dimension_numbers<[1], [0], [0], [1], [0, 0, 1, 1], [], []>} : vector<40x128xbf16>, vector<128x256xbf16>, vector<40x256xf32> -> vector<40x256xf32>
    %33 = arith.addf %29, %32 : vector<40x256xf32>
    %34 = vector.extract_strided_slice %14 {offsets = [56, 0], sizes = [40, 128], strides = [1, 1]} : vector<112x128xbf16> to vector<40x128xbf16>
    %c0_17 = arith.constant 0 : index
    %c0_18 = arith.constant 0 : index
    %35 = vector.load %arg3[%c0_17, %c0_18] : memref<640x256xbf16, #tpu.memory_space<vmem>>, vector<128x256xbf16>
    %cst_19 = arith.constant dense<0.000000e+00> : vector<40x256xf32>
    %36 = tpu.matmul %34, %35, %cst_19 {dimension_numbers = #tpu.dot_dimension_numbers<[1], [0], [0], [1], [0, 0, 1, 1], [], []>} : vector<40x128xbf16>, vector<128x256xbf16>, vector<40x256xf32> -> vector<40x256xf32>
    %37 = vector.extract_strided_slice %14 {offsets = [8, 0], sizes = [40, 128], strides = [1, 1]} : vector<112x128xbf16> to vector<40x128xbf16>
    %c128_20 = arith.constant 128 : index
    %c0_21 = arith.constant 0 : index
    %38 = vector.load %arg3[%c128_20, %c0_21] : memref<640x256xbf16, #tpu.memory_space<vmem>>, vector<128x256xbf16>
    %cst_22 = arith.constant dense<0.000000e+00> : vector<40x256xf32>
    %39 = tpu.matmul %37, %38, %cst_22 {dimension_numbers = #tpu.dot_dimension_numbers<[1], [0], [0], [1], [0, 0, 1, 1], [], []>} : vector<40x128xbf16>, vector<128x256xbf16>, vector<40x256xf32> -> vector<40x256xf32>
    %40 = arith.addf %36, %39 : vector<40x256xf32>
    %41 = vector.extract_strided_slice %14 {offsets = [64, 0], sizes = [40, 128], strides = [1, 1]} : vector<112x128xbf16> to vector<40x128xbf16>
    %c256_23 = arith.constant 256 : index
    %c0_24 = arith.constant 0 : index
    %42 = vector.load %arg3[%c256_23, %c0_24] : memref<640x256xbf16, #tpu.memory_space<vmem>>, vector<128x256xbf16>
    %cst_25 = arith.constant dense<0.000000e+00> : vector<40x256xf32>
    %43 = tpu.matmul %41, %42, %cst_25 {dimension_numbers = #tpu.dot_dimension_numbers<[1], [0], [0], [1], [0, 0, 1, 1], [], []>} : vector<40x128xbf16>, vector<128x256xbf16>, vector<40x256xf32> -> vector<40x256xf32>
    %44 = arith.addf %40, %43 : vector<40x256xf32>
    %45 = vector.extract_strided_slice %14 {offsets = [16, 0], sizes = [40, 128], strides = [1, 1]} : vector<112x128xbf16> to vector<40x128xbf16>
    %c384_26 = arith.constant 384 : index
    %c0_27 = arith.constant 0 : index
    %46 = vector.load %arg3[%c384_26, %c0_27] : memref<640x256xbf16, #tpu.memory_space<vmem>>, vector<128x256xbf16>
    %cst_28 = arith.constant dense<0.000000e+00> : vector<40x256xf32>
    %47 = tpu.matmul %45, %46, %cst_28 {dimension_numbers = #tpu.dot_dimension_numbers<[1], [0], [0], [1], [0, 0, 1, 1], [], []>} : vector<40x128xbf16>, vector<128x256xbf16>, vector<40x256xf32> -> vector<40x256xf32>
    %48 = arith.addf %44, %47 : vector<40x256xf32>
    %49 = vector.extract_strided_slice %14 {offsets = [72, 0], sizes = [40, 128], strides = [1, 1]} : vector<112x128xbf16> to vector<40x128xbf16>
    %c512_29 = arith.constant 512 : index
    %c0_30 = arith.constant 0 : index
    %50 = vector.load %arg3[%c512_29, %c0_30] : memref<640x256xbf16, #tpu.memory_space<vmem>>, vector<128x256xbf16>
    %cst_31 = arith.constant dense<0.000000e+00> : vector<40x256xf32>
    %51 = tpu.matmul %49, %50, %cst_31 {dimension_numbers = #tpu.dot_dimension_numbers<[1], [0], [0], [1], [0, 0, 1, 1], [], []>} : vector<40x128xbf16>, vector<128x256xbf16>, vector<40x256xf32> -> vector<40x256xf32>
    %52 = arith.addf %48, %51 : vector<40x256xf32>
    %53 = arith.maximumf %33, %52 : vector<40x256xf32>
    %54 = vector.extract_strided_slice %53 {offsets = [0, 0], sizes = [40, 128], strides = [1, 1]} : vector<40x256xf32> to vector<40x128xf32>
    %55 = vector.extract_strided_slice %53 {offsets = [0, 128], sizes = [40, 128], strides = [1, 1]} : vector<40x256xf32> to vector<40x128xf32>
    %56 = arith.maximumf %54, %55 : vector<40x128xf32>
    %c1 = arith.constant 1 : index
    %c0_32 = arith.constant 0 : index
    %57 = vector.load %arg7[%c1, %c0_32] : memref<8x128xf32, #tpu.memory_space<vmem>>, vector<1x128xf32>
    %58 = vector.broadcast %57 : vector<1x128xf32> to vector<40x128xf32>
    %59 = arith.addf %56, %58 : vector<40x128xf32>
    %cst_33 = arith.constant 0.000000e+00 : f32
    %60 = vector.broadcast %cst_33 : f32 to vector<40x128xf32>
    %61 = arith.maximumf %59, %60 : vector<40x128xf32>
    %62 = arith.truncf %61 : vector<40x128xf32> to vector<40x128xbf16>
    %63 = vector.extract_strided_slice %62 {offsets = [0, 0], sizes = [8, 128], strides = [1, 1]} : vector<40x128xbf16> to vector<8x128xbf16>
    %c0_34 = arith.constant 0 : index
    %c0_35 = arith.constant 0 : index
    %64 = vector.load %arg4[%c0_34, %c0_35] : memref<640x128xbf16, #tpu.memory_space<vmem>>, vector<128x128xbf16>
    %cst_36 = arith.constant dense<0.000000e+00> : vector<8x128xf32>
    %65 = tpu.matmul %63, %64, %cst_36 {dimension_numbers = #tpu.dot_dimension_numbers<[1], [0], [0], [1], [0, 0, 1, 1], [], []>} : vector<8x128xbf16>, vector<128x128xbf16>, vector<8x128xf32> -> vector<8x128xf32>
    %66 = vector.extract_strided_slice %62 {offsets = [8, 0], sizes = [8, 128], strides = [1, 1]} : vector<40x128xbf16> to vector<8x128xbf16>
    %c128_37 = arith.constant 128 : index
    %c0_38 = arith.constant 0 : index
    %67 = vector.load %arg4[%c128_37, %c0_38] : memref<640x128xbf16, #tpu.memory_space<vmem>>, vector<128x128xbf16>
    %cst_39 = arith.constant dense<0.000000e+00> : vector<8x128xf32>
    %68 = tpu.matmul %66, %67, %cst_39 {dimension_numbers = #tpu.dot_dimension_numbers<[1], [0], [0], [1], [0, 0, 1, 1], [], []>} : vector<8x128xbf16>, vector<128x128xbf16>, vector<8x128xf32> -> vector<8x128xf32>
    %69 = arith.addf %65, %68 : vector<8x128xf32>
    %70 = vector.extract_strided_slice %62 {offsets = [16, 0], sizes = [8, 128], strides = [1, 1]} : vector<40x128xbf16> to vector<8x128xbf16>
    %c256_40 = arith.constant 256 : index
    %c0_41 = arith.constant 0 : index
    %71 = vector.load %arg4[%c256_40, %c0_41] : memref<640x128xbf16, #tpu.memory_space<vmem>>, vector<128x128xbf16>
    %cst_42 = arith.constant dense<0.000000e+00> : vector<8x128xf32>
    %72 = tpu.matmul %70, %71, %cst_42 {dimension_numbers = #tpu.dot_dimension_numbers<[1], [0], [0], [1], [0, 0, 1, 1], [], []>} : vector<8x128xbf16>, vector<128x128xbf16>, vector<8x128xf32> -> vector<8x128xf32>
    %73 = arith.addf %69, %72 : vector<8x128xf32>
    %74 = vector.extract_strided_slice %62 {offsets = [24, 0], sizes = [8, 128], strides = [1, 1]} : vector<40x128xbf16> to vector<8x128xbf16>
    %c384_43 = arith.constant 384 : index
    %c0_44 = arith.constant 0 : index
    %75 = vector.load %arg4[%c384_43, %c0_44] : memref<640x128xbf16, #tpu.memory_space<vmem>>, vector<128x128xbf16>
    %cst_45 = arith.constant dense<0.000000e+00> : vector<8x128xf32>
    %76 = tpu.matmul %74, %75, %cst_45 {dimension_numbers = #tpu.dot_dimension_numbers<[1], [0], [0], [1], [0, 0, 1, 1], [], []>} : vector<8x128xbf16>, vector<128x128xbf16>, vector<8x128xf32> -> vector<8x128xf32>
    %77 = arith.addf %73, %76 : vector<8x128xf32>
    %78 = vector.extract_strided_slice %62 {offsets = [32, 0], sizes = [8, 128], strides = [1, 1]} : vector<40x128xbf16> to vector<8x128xbf16>
    %c512_46 = arith.constant 512 : index
    %c0_47 = arith.constant 0 : index
    %79 = vector.load %arg4[%c512_46, %c0_47] : memref<640x128xbf16, #tpu.memory_space<vmem>>, vector<128x128xbf16>
    %cst_48 = arith.constant dense<0.000000e+00> : vector<8x128xf32>
    %80 = tpu.matmul %78, %79, %cst_48 {dimension_numbers = #tpu.dot_dimension_numbers<[1], [0], [0], [1], [0, 0, 1, 1], [], []>} : vector<8x128xbf16>, vector<128x128xbf16>, vector<8x128xf32> -> vector<8x128xf32>
    %81 = arith.addf %77, %80 : vector<8x128xf32>
    %c2 = arith.constant 2 : index
    %c0_49 = arith.constant 0 : index
    %82 = vector.load %arg7[%c2, %c0_49] : memref<8x128xf32, #tpu.memory_space<vmem>>, vector<1x128xf32>
    %83 = vector.broadcast %82 : vector<1x128xf32> to vector<8x128xf32>
    %84 = arith.addf %81, %83 : vector<8x128xf32>
    %cst_50 = arith.constant 0.000000e+00 : f32
    %85 = vector.broadcast %cst_50 : f32 to vector<8x128xf32>
    %86 = arith.maximumf %84, %85 : vector<8x128xf32>
    %87 = arith.truncf %86 : vector<8x128xf32> to vector<8x128xbf16>
    %c0_51 = arith.constant 0 : index
    %c0_52 = arith.constant 0 : index
    %88 = vector.load %arg5[%c0_51, %c0_52] : memref<128x128xbf16, #tpu.memory_space<vmem>>, vector<128x128xbf16>
    %cst_53 = arith.constant dense<0.000000e+00> : vector<8x128xf32>
    %89 = tpu.matmul %87, %88, %cst_53 {dimension_numbers = #tpu.dot_dimension_numbers<[1], [0], [0], [1], [0, 0, 1, 1], [], []>} : vector<8x128xbf16>, vector<128x128xbf16>, vector<8x128xf32> -> vector<8x128xf32>
    %c3 = arith.constant 3 : index
    %c0_54 = arith.constant 0 : index
    %90 = vector.load %arg7[%c3, %c0_54] : memref<8x128xf32, #tpu.memory_space<vmem>>, vector<1x128xf32>
    %91 = vector.broadcast %90 : vector<1x128xf32> to vector<8x128xf32>
    %92 = arith.addf %89, %91 : vector<8x128xf32>
    %cst_55 = arith.constant 0.000000e+00 : f32
    %93 = vector.broadcast %cst_55 : f32 to vector<8x128xf32>
    %94 = arith.maximumf %92, %93 : vector<8x128xf32>
    %95 = arith.truncf %94 : vector<8x128xf32> to vector<8x128xbf16>
    %c0_56 = arith.constant 0 : index
    %c0_57 = arith.constant 0 : index
    %96 = vector.load %arg6[%c0_56, %c0_57] : memref<128x128xbf16, #tpu.memory_space<vmem>>, vector<128x128xbf16>
    %cst_58 = arith.constant dense<0.000000e+00> : vector<8x128xf32>
    %97 = tpu.matmul %95, %96, %cst_58 {dimension_numbers = #tpu.dot_dimension_numbers<[1], [0], [0], [1], [0, 0, 1, 1], [], []>} : vector<8x128xbf16>, vector<128x128xbf16>, vector<8x128xf32> -> vector<8x128xf32>
    %c4 = arith.constant 4 : index
    %c0_59 = arith.constant 0 : index
    %98 = vector.load %arg7[%c4, %c0_59] : memref<8x128xf32, #tpu.memory_space<vmem>>, vector<1x128xf32>
    %99 = vector.broadcast %98 : vector<1x128xf32> to vector<8x128xf32>
    %100 = arith.addf %97, %99 : vector<8x128xf32>
    %c0_60 = arith.constant 0 : index
    %c0_61 = arith.constant 0 : index
    %101 = vector.load %arg8[%c0_60, %c0_61] : memref<8x128xf32, #tpu.memory_space<vmem>>, vector<8x128xf32>
    tpu.vector_store %arg8[%c0_60, %c0_61], %100 {strides = array<i32>} : memref<8x128xf32, #tpu.memory_space<vmem>>, vector<8x128xf32>,
    return
  }
  func.func @transform_0(%arg0: i32) -> (i32, i32) {
    %c0_i32 = arith.constant 0 : i32
    %c0_i32_0 = arith.constant 0 : i32
    return %arg0, %c0_i32 : i32, i32
  }
  func.func @transform_1(%arg0: i32) -> (i32, i32) {
    %c0_i32 = arith.constant 0 : i32
    %c0_i32_0 = arith.constant 0 : i32
    %c0_i32_1 = arith.constant 0 : i32
    return %c0_i32, %c0_i32_0 : i32, i32
  }
  func.func @transform_2(%arg0: i32) -> (i32, i32) {
    %c0_i32 = arith.constant 0 : i32
    %c0_i32_0 = arith.constant 0 : i32
    %c0_i32_1 = arith.constant 0 : i32
    return %c0_i32, %c0_i32_0 : i32, i32
  }
  func.func @transform_3(%arg0: i32) -> (i32, i32) {
    %c0_i32 = arith.constant 0 : i32
    %c0_i32_0 = arith.constant 0 : i32
    %c0_i32_1 = arith.constant 0 : i32
    return %c0_i32, %c0_i32_0 : i32, i32
  }
  func.func @transform_4(%arg0: i32) -> (i32, i32) {
    %c0_i32 = arith.constant 0 : i32
    %c0_i32_0 = arith.constant 0 : i32
    %c0_i32_1 = arith.constant 0 : i32
    return %c0_i32, %c0_i32_0 : i32, i32
  }
  func.func @transform_5(%arg0: i32) -> (i32, i32) {
    %c0_i32 = arith.constant 0 : i32
    %c0_i32_0 = arith.constant 0 : i32
    %c0_i32_1 = arith.constant 0 : i32
    return %c0_i32, %c0_i32_0 : i32, i32
  }
  func.func @transform_6(%arg0: i32) -> (i32, i32) {
    %c0_i32 = arith.constant 0 : i32
    %c0_i32_0 = arith.constant 0 : i32
    %c0_i32_1 = arith.constant 0 : i32
    return %c0_i32, %c0_i32_0 : i32, i32
  }
  func.func @transform_7(%arg0: i32) -> (i32, i32) {
    %c0_i32 = arith.constant 0 : i32
    %c0_i32_0 = arith.constant 0 : i32
    return %arg0, %c0_i32 : i32, i32
  }
}

</mosaic_0001>

<llo_original>
// kernel: model4_forward.1
$region0: #{model4_forward.1}
  #allocation0 [shape = 'u32[]', space=smem, size = 0x4, offset = 0x4, fixed_abs, tag = 'smem constant byte address 0x4 - core index']
  #allocation1 [shape = 'u32[144,128]{1,0:T(1,128)}', space=vmem, size = 0x12000, scoped, tag = 'internal scratch']
  %s0 = inlined_call_operand.vmem [shape: bf16[224,480], index: 0, kind: input, shape index: {}]
  %s1 = inlined_call_operand.vmem [shape: bf16[480,256], index: 1, kind: input, shape index: {}]
  %s2 = inlined_call_operand.vmem [shape: bf16[640,256], index: 2, kind: input, shape index: {}]
  %s3 = inlined_call_operand.vmem [shape: bf16[640,128], index: 3, kind: input, shape index: {}]
  %s4 = inlined_call_operand.vmem [shape: bf16[128,128], index: 4, kind: input, shape index: {}]
  %s5 = inlined_call_operand.vmem [shape: bf16[128,128], index: 5, kind: input, shape index: {}]
  %s6 = inlined_call_operand.vmem [shape: f32[8,128], index: 6, kind: input, shape index: {}]
  %s7 = inlined_call_operand.hbm [shape: f32[8,128], index: 7, kind: output, shape index: {}]
  %s8 = sld [smem:[#allocation0]]
  $region38: #{model4_forward.1} parent=0
    _
  %s10 = ssub.s32 1, %s8
  %s11 = scalar_select 0, %s10, %s8
  $region1: #{model4_forward.1} parent=0
    #allocation2 [shape = 'u8[4096]{0}', space=vmem, size = 0x1000, scoped, tag = 'output window, operand 0, single buffered']
    #allocation3 [shape = 's32[1]{0}', space=sflag, size = 0x4, scoped, tag = 'scoped memory for model4_forward.1']
    %12 = vsyncpa [#allocation3], 0
    // Predicated region
    $region2: #{model4_forward.1} parent=1 // pred_check
      _
    $region3: #{model4_forward.1} parent=1 // pred_check_branch
      %14 = sbr.rel (0) target = $region5
    $region4: #{model4_forward.1} parent=1 // pred_region
      _
    $region5: #{model4_forward.1} parent=1 // pred_fallthru
      _
    // Predicated region
    $region6: #{model4_forward.1} parent=1 // pred_check
      _
    $region7: #{model4_forward.1} parent=1 // pred_check_branch
      %16 = sbr.rel (0) target = $region9
    $region8: #{model4_forward.1} parent=1 // pred_region
      _
    $region9: #{model4_forward.1} parent=1 // pred_fallthru
      _
    // Predicated region
    $region10: #{model4_forward.1} parent=1 // pred_check
      _
    $region11: #{model4_forward.1} parent=1 // pred_check_branch
      %18 = sbr.rel (0) target = $region13
    $region12: #{model4_forward.1} parent=1 // pred_region
      _
    $region13: #{model4_forward.1} parent=1 // pred_fallthru
      _
    // Predicated region
    $region14: #{model4_forward.1} parent=1 // pred_check
      _
    $region15: #{model4_forward.1} parent=1 // pred_check_branch
      %20 = sbr.rel (0) target = $region17
    $region16: #{model4_forward.1} parent=1 // pred_region
      _
    $region17: #{model4_forward.1} parent=1 // pred_fallthru
      _
    // Predicated region
    $region18: #{model4_forward.1} parent=1 // pred_check
      _
    $region19: #{model4_forward.1} parent=1 // pred_check_branch
      %22 = sbr.rel (0) target = $region21
    $region20: #{model4_forward.1} parent=1 // pred_region
      _
    $region21: #{model4_forward.1} parent=1 // pred_fallthru
      _
    // Predicated region
    $region22: #{model4_forward.1} parent=1 // pred_check
      _
    $region23: #{model4_forward.1} parent=1 // pred_check_branch
      %24 = sbr.rel (0) target = $region25
    $region24: #{model4_forward.1} parent=1 // pred_region
      _
    $region25: #{model4_forward.1} parent=1 // pred_fallthru
      _
    // Predicated region
    $region26: #{model4_forward.1} parent=1 // pred_check
      _
    $region27: #{model4_forward.1} parent=1 // pred_check_branch
      %26 = sbr.rel (0) target = $region29
    $region28: #{model4_forward.1} parent=1 // pred_region
      _
    $region29: #{model4_forward.1} parent=1 // pred_fallthru
      _
    %v28 = vld [vmem:[%s0] sm:$0xff]
    %v29 = vld [vmem:[%s0 + $0x8] sm:$0xff]
    %v30 = vld [vmem:[%s0 + $0x10] sm:$0xff]
    %v31 = vld [vmem:[%s0 + $0x18] sm:$0xff]
    %v32 = vld [vmem:[%s0 + $0x20] sm:$0xff]
    %v33 = vld [vmem:[%s0 + $0x28] sm:$0xff]
    %v34 = vld [vmem:[%s0 + $0x30] sm:$0xff]
    %v35 = vld [vmem:[%s0 + $0x38] sm:$0xff]
    %v36 = vld [vmem:[%s0 + $0x40] sm:$0xff]
    %v37 = vld [vmem:[%s0 + $0x48] sm:$0xff]
    %v38 = vld [vmem:[%s0 + $0x50] sm:$0xff]
    %v39 = vld [vmem:[%s0 + $0x58] sm:$0xff]
    %v40 = vld [vmem:[%s0 + $0x60] sm:$0xff]
    %v41 = vld [vmem:[%s0 + $0x68] sm:$0xff]
    %v42 = vld [vmem:[%s0 + $0x70] sm:$0xff]
    %v43 = vld [vmem:[%s0 + $0x78] sm:$0xff]
    %v44 = vld [vmem:[%s0 + $0x80] sm:$0xff]
    %v45 = vld [vmem:[%s0 + $0x88] sm:$0xff]
    %v46 = vld [vmem:[%s0 + $0x90] sm:$0xff]
    %v47 = vld [vmem:[%s0 + $0x98] sm:$0xff]
    %v48 = vld [vmem:[%s0 + $0xa0] sm:$0xff]
    %v49 = vld [vmem:[%s0 + $0xa8] sm:$0xff]
    %v50 = vld [vmem:[%s0 + $0xb0] sm:$0xff]
    %v51 = vld [vmem:[%s0 + $0xb8] sm:$0xff]
    %v52 = vld [vmem:[%s0 + $0xc0] sm:$0xff]
    %v53 = vld [vmem:[%s0 + $0xc8] sm:$0xff]
    %v54 = vld [vmem:[%s0 + $0xd0] sm:$0xff]
    %v55 = vld [vmem:[%s0 + $0xd8] sm:$0xff]
    %v56 = vld [vmem:[%s0 + $0xe0] sm:$0xff]
    %v57 = vld [vmem:[%s0 + $0xe8] sm:$0xff]
    %v58 = vld [vmem:[%s0 + $0xf0] sm:$0xff]
    %v59 = vld [vmem:[%s0 + $0xf8] sm:$0xff]
    %v60 = vld [vmem:[%s0 + $0x100] sm:$0xff]
    %v61 = vld [vmem:[%s0 + $0x108] sm:$0xff]
    %v62 = vld [vmem:[%s0 + $0x110] sm:$0xff]
    %v63 = vld [vmem:[%s0 + $0x118] sm:$0xff]
    %v64 = vld [vmem:[%s0 + $0x120] sm:$0xff]
    %v65 = vld [vmem:[%s0 + $0x128] sm:$0xff]
    %v66 = vld [vmem:[%s0 + $0x130] sm:$0xff]
    %v67 = vld [vmem:[%s0 + $0x138] sm:$0xff]
    %v68 = vld [vmem:[%s0 + $0x140] sm:$0xff]
    %v69 = vld [vmem:[%s0 + $0x148] sm:$0xff]
    %v70 = vld [vmem:[%s0 + $0x150] sm:$0xff]
    %v71 = vld [vmem:[%s0 + $0x158] sm:$0xff]
    %v72 = vld [vmem:[%s0 + $0x160] sm:$0xff]
    %v73 = vld [vmem:[%s0 + $0x168] sm:$0xff]
    %v74 = vld [vmem:[%s0 + $0x170] sm:$0xff]
    %v75 = vld [vmem:[%s0 + $0x178] sm:$0xff]
    %v76 = vld [vmem:[%s0 + $0x180] sm:$0xff]
    %v77 = vld [vmem:[%s0 + $0x188] sm:$0xff]
    %v78 = vld [vmem:[%s0 + $0x190] sm:$0xff]
    %v79 = vld [vmem:[%s0 + $0x198] sm:$0xff]
    %v80 = vld [vmem:[%s0 + $0x1a0] sm:$0xff]
    %v81 = vld [vmem:[%s0 + $0x1a8] sm:$0xff]
    %v82 = vld [vmem:[%s0 + $0x1b0] sm:$0xff]
    %v83 = vld [vmem:[%s0 + $0x1b8] sm:$0xff]
    %v84 = vld [vmem:[%s1] sm:$0xff]
    %v85 = vld [vmem:[%s1 + $0x8] sm:$0xff]
    %v86 = vld [vmem:[%s1 + $0x10] sm:$0xff]
    %v87 = vld [vmem:[%s1 + $0x18] sm:$0xff]
    %v88 = vld [vmem:[%s1 + $0x20] sm:$0xff]
    %v89 = vld [vmem:[%s1 + $0x28] sm:$0xff]
    %v90 = vld [vmem:[%s1 + $0x30] sm:$0xff]
    %v91 = vld [vmem:[%s1 + $0x38] sm:$0xff]
    %v92 = vld [vmem:[%s1 + $0x40] sm:$0xff]
    %v93 = vld [vmem:[%s1 + $0x48] sm:$0xff]
    %v94 = vld [vmem:[%s1 + $0x50] sm:$0xff]
    %v95 = vld [vmem:[%s1 + $0x58] sm:$0xff]
    %v96 = vld [vmem:[%s1 + $0x60] sm:$0xff]
    %v97 = vld [vmem:[%s1 + $0x68] sm:$0xff]
    %v98 = vld [vmem:[%s1 + $0x70] sm:$0xff]
    %v99 = vld [vmem:[%s1 + $0x78] sm:$0xff]
    %v100 = vld [vmem:[%s1 + $0x80] sm:$0xff]
    %v101 = vld [vmem:[%s1 + $0x88] sm:$0xff]
    %v102 = vld [vmem:[%s1 + $0x90] sm:$0xff]
    %v103 = vld [vmem:[%s1 + $0x98] sm:$0xff]
    %v104 = vld [vmem:[%s1 + $0xa0] sm:$0xff]
    %v105 = vld [vmem:[%s1 + $0xa8] sm:$0xff]
    %v106 = vld [vmem:[%s1 + $0xb0] sm:$0xff]
    %v107 = vld [vmem:[%s1 + $0xb8] sm:$0xff]
    %v108 = vld [vmem:[%s1 + $0xc0] sm:$0xff]
    %v109 = vld [vmem:[%s1 + $0xc8] sm:$0xff]
    %v110 = vld [vmem:[%s1 + $0xd0] sm:$0xff]
    %v111 = vld [vmem:[%s1 + $0xd8] sm:$0xff]
    %v112 = vld [vmem:[%s1 + $0xe0] sm:$0xff]
    %v113 = vld [vmem:[%s1 + $0xe8] sm:$0xff]
    %v114 = vld [vmem:[%s1 + $0xf0] sm:$0xff]
    %v115 = vld [vmem:[%s1 + $0xf8] sm:$0xff]
    %v116 = vld [vmem:[%s1 + $0x100] sm:$0xff]
    %v117 = vld [vmem:[%s1 + $0x108] sm:$0xff]
    %v118 = vld [vmem:[%s1 + $0x110] sm:$0xff]
    %v119 = vld [vmem:[%s1 + $0x118] sm:$0xff]
    %v120 = vld [vmem:[%s1 + $0x120] sm:$0xff]
    %v121 = vld [vmem:[%s1 + $0x128] sm:$0xff]
    %v122 = vld [vmem:[%s1 + $0x130] sm:$0xff]
    %v123 = vld [vmem:[%s1 + $0x138] sm:$0xff]
    %v124 = vld [vmem:[%s1 + $0x140] sm:$0xff]
    %v125 = vld [vmem:[%s1 + $0x148] sm:$0xff]
    %v126 = vld [vmem:[%s1 + $0x150] sm:$0xff]
    %v127 = vld [vmem:[%s1 + $0x158] sm:$0xff]
    %v128 = vld [vmem:[%s1 + $0x160] sm:$0xff]
    %v129 = vld [vmem:[%s1 + $0x168] sm:$0xff]
    %v130 = vld [vmem:[%s1 + $0x170] sm:$0xff]
    %v131 = vld [vmem:[%s1 + $0x178] sm:$0xff]
    %v132 = vld [vmem:[%s1 + $0x180] sm:$0xff]
    %v133 = vld [vmem:[%s1 + $0x188] sm:$0xff]
    %v134 = vld [vmem:[%s1 + $0x190] sm:$0xff]
    %v135 = vld [vmem:[%s1 + $0x198] sm:$0xff]
    %v136 = vld [vmem:[%s1 + $0x1a0] sm:$0xff]
    %v137 = vld [vmem:[%s1 + $0x1a8] sm:$0xff]
    %v138 = vld [vmem:[%s1 + $0x1b0] sm:$0xff]
    %v139 = vld [vmem:[%s1 + $0x1b8] sm:$0xff]
    %v140 = vld [vmem:[%s1 + $0x1c0] sm:$0xff]
    %v141 = vld [vmem:[%s1 + $0x1c8] sm:$0xff]
    %v142 = vld [vmem:[%s1 + $0x1d0] sm:$0xff]
    %v143 = vld [vmem:[%s1 + $0x1d8] sm:$0xff]
    %v200 = vunpack.c.l.b16 %v28
    %v201 = vunpack.c.h.b16 %v28
    %v202 = vunpack.c.l.b16 %v29
    %v203 = vunpack.c.h.b16 %v29
    %v204 = vunpack.c.l.b16 %v30
    %v205 = vunpack.c.h.b16 %v30
    %v206 = vunpack.c.l.b16 %v31
    %v207 = vunpack.c.h.b16 %v31
    %v208 = vunpack.c.l.b16 %v32
    %v209 = vunpack.c.h.b16 %v32
    %v210 = vunpack.c.l.b16 %v33
    %v211 = vunpack.c.h.b16 %v33
    %v212 = vunpack.c.l.b16 %v34
    %v213 = vunpack.c.h.b16 %v34
    %v214 = vunpack.c.l.b16 %v35
    %v215 = vunpack.c.h.b16 %v35
    %v216 = vunpack.c.l.b16 %v36
    %v217 = vunpack.c.h.b16 %v36
    %v218 = vunpack.c.l.b16 %v37
    %v219 = vunpack.c.h.b16 %v37
    %v220 = vunpack.c.l.b16 %v38
    %v221 = vunpack.c.h.b16 %v38
    %v222 = vunpack.c.l.b16 %v39
    %v223 = vunpack.c.h.b16 %v39
    %v224 = vunpack.c.l.b16 %v40
    %v225 = vunpack.c.h.b16 %v40
    %v226 = vunpack.c.l.b16 %v41
    %v227 = vunpack.c.h.b16 %v41
    %v228 = vunpack.c.l.b16 %v42
    %v229 = vunpack.c.h.b16 %v42
    %v230 = vunpack.c.l.b16 %v43
    %v231 = vunpack.c.h.b16 %v43
    %v232 = vunpack.c.l.b16 %v44
    %v233 = vunpack.c.h.b16 %v44
    %v234 = vunpack.c.l.b16 %v45
    %v235 = vunpack.c.h.b16 %v45
    %v236 = vunpack.c.l.b16 %v46
    %v237 = vunpack.c.h.b16 %v46
    %v238 = vunpack.c.l.b16 %v47
    %v239 = vunpack.c.h.b16 %v47
    %v240 = vunpack.c.l.b16 %v48
    %v241 = vunpack.c.h.b16 %v48
    %v242 = vunpack.c.l.b16 %v49
    %v243 = vunpack.c.h.b16 %v49
    %v244 = vunpack.c.l.b16 %v50
    %v245 = vunpack.c.h.b16 %v50
    %v246 = vunpack.c.l.b16 %v51
    %v247 = vunpack.c.h.b16 %v51
    %v248 = vunpack.c.l.b16 %v52
    %v249 = vunpack.c.h.b16 %v52
    %v250 = vunpack.c.l.b16 %v53
    %v251 = vunpack.c.h.b16 %v53
    %v252 = vunpack.c.l.b16 %v54
    %v253 = vunpack.c.h.b16 %v54
    %v254 = vunpack.c.l.b16 %v55
    %v255 = vunpack.c.h.b16 %v55
    %v256 = vunpack.c.l.b16 %v56
    %v257 = vunpack.c.h.b16 %v56
    %v258 = vunpack.c.l.b16 %v57
    %v259 = vunpack.c.h.b16 %v57
    %v260 = vunpack.c.l.b16 %v58
    %v261 = vunpack.c.h.b16 %v58
    %v262 = vunpack.c.l.b16 %v59
    %v263 = vunpack.c.h.b16 %v59
    %v264 = vunpack.c.l.b16 %v60
    %v265 = vunpack.c.h.b16 %v60
    %v266 = vunpack.c.l.b16 %v61
    %v267 = vunpack.c.h.b16 %v61
    %v268 = vunpack.c.l.b16 %v62
    %v269 = vunpack.c.h.b16 %v62
    %v270 = vunpack.c.l.b16 %v63
    %v271 = vunpack.c.h.b16 %v63
    %v272 = vunpack.c.l.b16 %v64
    %v273 = vunpack.c.h.b16 %v64
    %v274 = vunpack.c.l.b16 %v65
    %v275 = vunpack.c.h.b16 %v65
    %v276 = vunpack.c.l.b16 %v66
    %v277 = vunpack.c.h.b16 %v66
    %v278 = vunpack.c.l.b16 %v67
    %v279 = vunpack.c.h.b16 %v67
    %v280 = vunpack.c.l.b16 %v68
    %v281 = vunpack.c.h.b16 %v68
    %v282 = vunpack.c.l.b16 %v69
    %v283 = vunpack.c.h.b16 %v69
    %v284 = vunpack.c.l.b16 %v70
    %v285 = vunpack.c.h.b16 %v70
    %v286 = vunpack.c.l.b16 %v71
    %v287 = vunpack.c.h.b16 %v71
    %v288 = vunpack.c.l.b16 %v72
    %v289 = vunpack.c.h.b16 %v72
    %v290 = vunpack.c.l.b16 %v73
    %v291 = vunpack.c.h.b16 %v73
    %v292 = vunpack.c.l.b16 %v74
    %v293 = vunpack.c.h.b16 %v74
    %v294 = vunpack.c.l.b16 %v75
    %v295 = vunpack.c.h.b16 %v75
    %v296 = vunpack.c.l.b16 %v76
    %v297 = vunpack.c.h.b16 %v76
    %v298 = vunpack.c.l.b16 %v77
    %v299 = vunpack.c.h.b16 %v77
    %v300 = vunpack.c.l.b16 %v78
    %v301 = vunpack.c.h.b16 %v78
    %v302 = vunpack.c.l.b16 %v79
    %v303 = vunpack.c.h.b16 %v79
    %v304 = vunpack.c.l.b16 %v80
    %v305 = vunpack.c.h.b16 %v80
    %v306 = vunpack.c.l.b16 %v81
    %v307 = vunpack.c.h.b16 %v81
    %v308 = vunpack.c.l.b16 %v82
    %v309 = vunpack.c.h.b16 %v82
    %v310 = vunpack.c.l.b16 %v83
    %v311 = vunpack.c.h.b16 %v83
    %v312 = vpack.c.b16 %v204, %v200
    %v313 = vpack.c.b16 %v205, %v201
    %v314 = vpack.c.b16 %v206, %v202
    %v315 = vpack.c.b16 %v207, %v203
    %v316 = vpack.c.b16 %v212, %v208
    %v317 = vpack.c.b16 %v213, %v209
    %v318 = vpack.c.b16 %v214, %v210
    %v319 = vpack.c.b16 %v215, %v211
    %v320 = vpack.c.b16 %v220, %v216
    %v321 = vpack.c.b16 %v221, %v217
    %v322 = vpack.c.b16 %v222, %v218
    %v323 = vpack.c.b16 %v223, %v219
    %v324 = vpack.c.b16 %v228, %v224
    %v325 = vpack.c.b16 %v229, %v225
    %v326 = vpack.c.b16 %v230, %v226
    %v327 = vpack.c.b16 %v231, %v227
    %v328 = vpack.c.b16 %v236, %v232
    %v329 = vpack.c.b16 %v237, %v233
    %v330 = vpack.c.b16 %v238, %v234
    %v331 = vpack.c.b16 %v239, %v235
    %v332 = vpack.c.b16 %v244, %v240
    %v333 = vpack.c.b16 %v245, %v241
    %v334 = vpack.c.b16 %v246, %v242
    %v335 = vpack.c.b16 %v247, %v243
    %v336 = vpack.c.b16 %v252, %v248
    %v337 = vpack.c.b16 %v253, %v249
    %v338 = vpack.c.b16 %v254, %v250
    %v339 = vpack.c.b16 %v255, %v251
    %v340 = vpack.c.b16 %v260, %v256
    %v341 = vpack.c.b16 %v261, %v257
    %v342 = vpack.c.b16 %v262, %v258
    %v343 = vpack.c.b16 %v263, %v259
    %v344 = vpack.c.b16 %v268, %v264
    %v345 = vpack.c.b16 %v269, %v265
    %v346 = vpack.c.b16 %v270, %v266
    %v347 = vpack.c.b16 %v271, %v267
    %v348 = vpack.c.b16 %v276, %v272
    %v349 = vpack.c.b16 %v277, %v273
    %v350 = vpack.c.b16 %v278, %v274
    %v351 = vpack.c.b16 %v279, %v275
    %v352 = vpack.c.b16 %v284, %v280
    %v353 = vpack.c.b16 %v285, %v281
    %v354 = vpack.c.b16 %v286, %v282
    %v355 = vpack.c.b16 %v287, %v283
    %v356 = vpack.c.b16 %v292, %v288
    %v357 = vpack.c.b16 %v293, %v289
    %v358 = vpack.c.b16 %v294, %v290
    %v359 = vpack.c.b16 %v295, %v291
    %v360 = vpack.c.b16 %v300, %v296
    %v361 = vpack.c.b16 %v301, %v297
    %v362 = vpack.c.b16 %v302, %v298
    %v363 = vpack.c.b16 %v303, %v299
    %v364 = vpack.c.b16 %v308, %v304
    %v365 = vpack.c.b16 %v309, %v305
    %v366 = vpack.c.b16 %v310, %v306
    %v367 = vpack.c.b16 %v311, %v307
    %v470 = vunpack.c.l.b16 %v84
    %v471 = vunpack.c.h.b16 %v84
    %v472 = vunpack.c.l.b16 %v85
    %v473 = vunpack.c.h.b16 %v85
    %v474 = vunpack.c.l.b16 %v86
    %v475 = vunpack.c.h.b16 %v86
    %v476 = vunpack.c.l.b16 %v87
    %v477 = vunpack.c.h.b16 %v87
    %v478 = vunpack.c.l.b16 %v88
    %v479 = vunpack.c.h.b16 %v88
    %v480 = vunpack.c.l.b16 %v89
    %v481 = vunpack.c.h.b16 %v89
    %v482 = vunpack.c.l.b16 %v90
    %v483 = vunpack.c.h.b16 %v90
    %v484 = vunpack.c.l.b16 %v91
    %v485 = vunpack.c.h.b16 %v91
    %v486 = vunpack.c.l.b16 %v92
    %v487 = vunpack.c.h.b16 %v92
    %v488 = vunpack.c.l.b16 %v93
    %v489 = vunpack.c.h.b16 %v93
    %v490 = vunpack.c.l.b16 %v94
    %v491 = vunpack.c.h.b16 %v94
    %v492 = vunpack.c.l.b16 %v95
    %v493 = vunpack.c.h.b16 %v95
    %v494 = vunpack.c.l.b16 %v96
    %v495 = vunpack.c.h.b16 %v96
    %v496 = vunpack.c.l.b16 %v97
    %v497 = vunpack.c.h.b16 %v97
    %v498 = vunpack.c.l.b16 %v98
    %v499 = vunpack.c.h.b16 %v98
    %v500 = vunpack.c.l.b16 %v99
    %v501 = vunpack.c.h.b16 %v99
    %v502 = vunpack.c.l.b16 %v100
    %v503 = vunpack.c.h.b16 %v100
    %v504 = vunpack.c.l.b16 %v101
    %v505 = vunpack.c.h.b16 %v101
    %v506 = vunpack.c.l.b16 %v102
    %v507 = vunpack.c.h.b16 %v102
    %v508 = vunpack.c.l.b16 %v103
    %v509 = vunpack.c.h.b16 %v103
    %v510 = vunpack.c.l.b16 %v104
    %v511 = vunpack.c.h.b16 %v104
    %v512 = vunpack.c.l.b16 %v105
    %v513 = vunpack.c.h.b16 %v105
    %v514 = vunpack.c.l.b16 %v106
    %v515 = vunpack.c.h.b16 %v106
    %v516 = vunpack.c.l.b16 %v107
    %v517 = vunpack.c.h.b16 %v107
    %v518 = vunpack.c.l.b16 %v108
    %v519 = vunpack.c.h.b16 %v108
    %v520 = vunpack.c.l.b16 %v109
    %v521 = vunpack.c.h.b16 %v109
    %v522 = vunpack.c.l.b16 %v110
    %v523 = vunpack.c.h.b16 %v110
    %v524 = vunpack.c.l.b16 %v111
    %v525 = vunpack.c.h.b16 %v111
    %v526 = vunpack.c.l.b16 %v112
    %v527 = vunpack.c.h.b16 %v112
    %v528 = vunpack.c.l.b16 %v113
    %v529 = vunpack.c.h.b16 %v113
    %v530 = vunpack.c.l.b16 %v114
    %v531 = vunpack.c.h.b16 %v114
    %v532 = vunpack.c.l.b16 %v115
    %v533 = vunpack.c.h.b16 %v115
    %v534 = vunpack.c.l.b16 %v116
    %v535 = vunpack.c.h.b16 %v116
    %v536 = vunpack.c.l.b16 %v117
    %v537 = vunpack.c.h.b16 %v117
    %v538 = vunpack.c.l.b16 %v118
    %v539 = vunpack.c.h.b16 %v118
    %v540 = vunpack.c.l.b16 %v119
    %v541 = vunpack.c.h.b16 %v119
    %v542 = vunpack.c.l.b16 %v120
    %v543 = vunpack.c.h.b16 %v120
    %v544 = vunpack.c.l.b16 %v121
    %v545 = vunpack.c.h.b16 %v121
    %v546 = vunpack.c.l.b16 %v122
    %v547 = vunpack.c.h.b16 %v122
    %v548 = vunpack.c.l.b16 %v123
    %v549 = vunpack.c.h.b16 %v123
    %v550 = vunpack.c.l.b16 %v124
    %v551 = vunpack.c.h.b16 %v124
    %v552 = vunpack.c.l.b16 %v125
    %v553 = vunpack.c.h.b16 %v125
    %v554 = vunpack.c.l.b16 %v126
    %v555 = vunpack.c.h.b16 %v126
    %v556 = vunpack.c.l.b16 %v127
    %v557 = vunpack.c.h.b16 %v127
    %v558 = vunpack.c.l.b16 %v128
    %v559 = vunpack.c.h.b16 %v128
    %v560 = vunpack.c.l.b16 %v129
    %v561 = vunpack.c.h.b16 %v129
    %v562 = vunpack.c.l.b16 %v130
    %v563 = vunpack.c.h.b16 %v130
    %v564 = vunpack.c.l.b16 %v131
    %v565 = vunpack.c.h.b16 %v131
    %v566 = vunpack.c.l.b16 %v132
    %v567 = vunpack.c.h.b16 %v132
    %v568 = vunpack.c.l.b16 %v133
    %v569 = vunpack.c.h.b16 %v133
    %v570 = vunpack.c.l.b16 %v134
    %v571 = vunpack.c.h.b16 %v134
    %v572 = vunpack.c.l.b16 %v135
    %v573 = vunpack.c.h.b16 %v135
    %v574 = vunpack.c.l.b16 %v136
    %v575 = vunpack.c.h.b16 %v136
    %v576 = vunpack.c.l.b16 %v137
    %v577 = vunpack.c.h.b16 %v137
    %v578 = vunpack.c.l.b16 %v138
    %v579 = vunpack.c.h.b16 %v138
    %v580 = vunpack.c.l.b16 %v139
    %v581 = vunpack.c.h.b16 %v139
    %v582 = vunpack.c.l.b16 %v140
    %v583 = vunpack.c.h.b16 %v140
    %v584 = vunpack.c.l.b16 %v141
    %v585 = vunpack.c.h.b16 %v141
    %v586 = vunpack.c.l.b16 %v142
    %v587 = vunpack.c.h.b16 %v142
    %v588 = vunpack.c.l.b16 %v143
    %v589 = vunpack.c.h.b16 %v143
    %v590 = vpack.c.b16 %v472, %v470
    %v591 = vpack.c.b16 %v473, %v471
    %v592 = vpack.c.b16 %v476, %v474
    %v593 = vpack.c.b16 %v477, %v475
    %v594 = vpack.c.b16 %v480, %v478
    %v595 = vpack.c.b16 %v481, %v479
    %v596 = vpack.c.b16 %v484, %v482
    %v597 = vpack.c.b16 %v485, %v483
    %v598 = vpack.c.b16 %v488, %v486
    %v599 = vpack.c.b16 %v489, %v487
    %v600 = vpack.c.b16 %v492, %v490
    %v601 = vpack.c.b16 %v493, %v491
    %v602 = vpack.c.b16 %v496, %v494
    %v603 = vpack.c.b16 %v497, %v495
    %v604 = vpack.c.b16 %v500, %v498
    %v605 = vpack.c.b16 %v501, %v499
    %v606 = vpack.c.b16 %v504, %v502
    %v607 = vpack.c.b16 %v505, %v503
    %v608 = vpack.c.b16 %v508, %v506
    %v609 = vpack.c.b16 %v509, %v507
    %v610 = vpack.c.b16 %v512, %v510
    %v611 = vpack.c.b16 %v513, %v511
    %v612 = vpack.c.b16 %v516, %v514
    %v613 = vpack.c.b16 %v517, %v515
    %v614 = vpack.c.b16 %v520, %v518
    %v615 = vpack.c.b16 %v521, %v519
    %v616 = vpack.c.b16 %v524, %v522
    %v617 = vpack.c.b16 %v525, %v523
    %v618 = vpack.c.b16 %v528, %v526
    %v619 = vpack.c.b16 %v529, %v527
    %v620 = vpack.c.b16 %v532, %v530
    %v621 = vpack.c.b16 %v533, %v531
    %v622 = vpack.c.b16 %v536, %v534
    %v623 = vpack.c.b16 %v537, %v535
    %v624 = vpack.c.b16 %v540, %v538
    %v625 = vpack.c.b16 %v541, %v539
    %v626 = vpack.c.b16 %v544, %v542
    %v627 = vpack.c.b16 %v545, %v543
    %v628 = vpack.c.b16 %v548, %v546
    %v629 = vpack.c.b16 %v549, %v547
    %v630 = vpack.c.b16 %v552, %v550
    %v631 = vpack.c.b16 %v553, %v551
    %v632 = vpack.c.b16 %v556, %v554
    %v633 = vpack.c.b16 %v557, %v555
    %v634 = vpack.c.b16 %v560, %v558
    %v635 = vpack.c.b16 %v561, %v559
    %v636 = vpack.c.b16 %v564, %v562
    %v637 = vpack.c.b16 %v565, %v563
    %v638 = vpack.c.b16 %v568, %v566
    %v639 = vpack.c.b16 %v569, %v567
    %v640 = vpack.c.b16 %v572, %v570
    %v641 = vpack.c.b16 %v573, %v571
    %v642 = vpack.c.b16 %v576, %v574
    %v643 = vpack.c.b16 %v577, %v575
    %v644 = vpack.c.b16 %v580, %v578
    %v645 = vpack.c.b16 %v581, %v579
    %v646 = vpack.c.b16 %v584, %v582
    %v647 = vpack.c.b16 %v585, %v583
    %v648 = vpack.c.b16 %v588, %v586
    %v649 = vpack.c.b16 %v589, %v587
    %vm710 = vcmask 785408
    %v712 = vsel %vm710, %v315, 0
    %v715 = vsel %vm710, %v319, 0
    %v718 = vsel %vm710, %v323, 0
    %v721 = vsel %vm710, %v327, 0
    %v724 = vsel %vm710, %v331, 0
    %v727 = vsel %vm710, %v335, 0
    %v730 = vsel %vm710, %v339, 0
    %v733 = vsel %vm710, %v343, 0
    %v736 = vsel %vm710, %v347, 0
    %v739 = vsel %vm710, %v351, 0
    %v742 = vsel %vm710, %v355, 0
    %v745 = vsel %vm710, %v359, 0
    %v748 = vsel %vm710, %v363, 0
    %v751 = vsel %vm710, %v367, 0
    %753 = vmatprep.subr.bf16.mxu0 %v605
    %754 = vmatpush1.bf16.msra.mxu0 %v604
    %755 = vmatprep.subr.bf16.mxu0 %v603
    %756 = vmatpush1.bf16.msra.mxu0 %v602
    %757 = vmatprep.subr.bf16.mxu0 %v601
    %758 = vmatpush1.bf16.msra.mxu0 %v600
    %759 = vmatprep.subr.bf16.mxu0 %v599
    %760 = vmatpush1.bf16.msra.mxu0 %v598
    %761 = vmatprep.subr.bf16.mxu0 %v597
    %762 = vmatpush1.bf16.msra.mxu0 %v596
    %763 = vmatprep.subr.bf16.mxu0 %v595
    %764 = vmatpush1.bf16.msra.mxu0 %v594
    %765 = vmatprep.subr.bf16.mxu0 %v593
    %766 = vmatpush1.bf16.msra.mxu0 %v592
    %767 = vmatprep.subr.bf16.mxu0 %v591
    %768 = vmatpush1.bf16.msra.mxu0 %v590
    %769 = vmatprep.subr.bf16.mxu0 %v621
    %770 = vmatpush2.bf16.msra.mxu0 %v620
    %771 = vmatprep.subr.bf16.mxu0 %v619
    %772 = vmatpush2.bf16.msra.mxu0 %v618
    %773 = vmatprep.subr.bf16.mxu0 %v617
    %774 = vmatpush2.bf16.msra.mxu0 %v616
    %775 = vmatprep.subr.bf16.mxu0 %v615
    %776 = vmatpush2.bf16.msra.mxu0 %v614
    %777 = vmatprep.subr.bf16.mxu0 %v613
    %778 = vmatpush2.bf16.msra.mxu0 %v612
    %779 = vmatprep.subr.bf16.mxu0 %v611
    %780 = vmatpush2.bf16.msra.mxu0 %v610
    %781 = vmatprep.subr.bf16.mxu0 %v609
    %782 = vmatpush2.bf16.msra.mxu0 %v608
    %783 = vmatprep.subr.bf16.mxu0 %v607
    %784 = vmatpush2.bf16.msra.mxu0 %v606
    %785 = vmatprep.mubr.bf16.mxu0 %v313
    %786 = vmatmul.mubr.bf16.gmra.mxu0 %v312
    %v787 = vpop.f32.mrf.mxu0
    %v788 = vadd.f32 0.0, %v787
    %v789 = vpop.f32.mrf.mxu0
    %v790 = vadd.f32 0.0, %v789
    %v791 = vpop.f32.mrf.mxu0
    %v792 = vadd.f32 0.0, %v791
    %v793 = vpop.f32.mrf.mxu0
    %v794 = vadd.f32 0.0, %v793
    %795 = vmatprep.mubr.bf16.mxu0 %v317
    %796 = vmatmul.mubr.bf16.gmra.mxu0 %v316
    %v797 = vpop.f32.mrf.mxu0
    %v798 = vadd.f32 0.0, %v797
    %v799 = vpop.f32.mrf.mxu0
    %v800 = vadd.f32 0.0, %v799
    %v801 = vpop.f32.mrf.mxu0
    %v802 = vadd.f32 0.0, %v801
    %v803 = vpop.f32.mrf.mxu0
    %v804 = vadd.f32 0.0, %v803
    %805 = vmatprep.mubr.bf16.mxu0 %v321
    %806 = vmatmul.mubr.bf16.gmra.mxu0 %v320
    %v807 = vpop.f32.mrf.mxu0
    %v808 = vadd.f32 0.0, %v807
    %v809 = vpop.f32.mrf.mxu0
    %v810 = vadd.f32 0.0, %v809
    %v811 = vpop.f32.mrf.mxu0
    %v812 = vadd.f32 0.0, %v811
    %v813 = vpop.f32.mrf.mxu0
    %v814 = vadd.f32 0.0, %v813
    %815 = vmatprep.mubr.bf16.mxu0 %v325
    %816 = vmatmul.mubr.bf16.gmra.mxu0 %v324
    %v817 = vpop.f32.mrf.mxu0
    %v818 = vadd.f32 0.0, %v817
    %v819 = vpop.f32.mrf.mxu0
    %v820 = vadd.f32 0.0, %v819
    %v821 = vpop.f32.mrf.mxu0
    %v822 = vadd.f32 0.0, %v821
    %v823 = vpop.f32.mrf.mxu0
    %v824 = vadd.f32 0.0, %v823
    %825 = vmatprep.mubr.bf16.mxu0 %v329
    %826 = vmatmul.mubr.bf16.gmra.mxu0 %v328
    %v827 = vpop.f32.mrf.mxu0
    %v828 = vadd.f32 0.0, %v827
    %v829 = vpop.f32.mrf.mxu0
    %v830 = vadd.f32 0.0, %v829
    %v831 = vpop.f32.mrf.mxu0
    %v832 = vadd.f32 0.0, %v831
    %v833 = vpop.f32.mrf.mxu0
    %v834 = vadd.f32 0.0, %v833
    %835 = vmatprep.mubr.bf16.mxu0 %v333
    %836 = vmatmul.mubr.bf16.gmra.mxu0 %v332
    %v837 = vpop.f32.mrf.mxu0
    %v838 = vadd.f32 0.0, %v837
    %v839 = vpop.f32.mrf.mxu0
    %v840 = vadd.f32 0.0, %v839
    %v841 = vpop.f32.mrf.mxu0
    %v842 = vadd.f32 0.0, %v841
    %v843 = vpop.f32.mrf.mxu0
    %v844 = vadd.f32 0.0, %v843
    %845 = vmatprep.mubr.bf16.mxu0 %v337
    %846 = vmatmul.mubr.bf16.gmra.mxu0 %v336
    %v847 = vpop.f32.mrf.mxu0
    %v848 = vadd.f32 0.0, %v847
    %v849 = vpop.f32.mrf.mxu0
    %v850 = vadd.f32 0.0, %v849
    %v851 = vpop.f32.mrf.mxu0
    %v852 = vadd.f32 0.0, %v851
    %v853 = vpop.f32.mrf.mxu0
    %v854 = vadd.f32 0.0, %v853
    %855 = vmatprep.mubr.bf16.mxu0 %v341
    %856 = vmatmul.mubr.bf16.gmra.mxu0 %v340
    %v857 = vpop.f32.mrf.mxu0
    %v858 = vadd.f32 0.0, %v857
    %v859 = vpop.f32.mrf.mxu0
    %v860 = vadd.f32 0.0, %v859
    %v861 = vpop.f32.mrf.mxu0
    %v862 = vadd.f32 0.0, %v861
    %v863 = vpop.f32.mrf.mxu0
    %v864 = vadd.f32 0.0, %v863
    %865 = vmatprep.mubr.bf16.mxu0 %v345
    %866 = vmatmul.mubr.bf16.gmra.mxu0 %v344
    %v867 = vpop.f32.mrf.mxu0
    %v868 = vadd.f32 0.0, %v867
    %v869 = vpop.f32.mrf.mxu0
    %v870 = vadd.f32 0.0, %v869
    %v871 = vpop.f32.mrf.mxu0
    %v872 = vadd.f32 0.0, %v871
    %v873 = vpop.f32.mrf.mxu0
    %v874 = vadd.f32 0.0, %v873
    %875 = vmatprep.mubr.bf16.mxu0 %v349
    %876 = vmatmul.mubr.bf16.gmra.mxu0 %v348
    %v877 = vpop.f32.mrf.mxu0
    %v878 = vadd.f32 0.0, %v877
    %v879 = vpop.f32.mrf.mxu0
    %v880 = vadd.f32 0.0, %v879
    %v881 = vpop.f32.mrf.mxu0
    %v882 = vadd.f32 0.0, %v881
    %v883 = vpop.f32.mrf.mxu0
    %v884 = vadd.f32 0.0, %v883
    %885 = vmatprep.mubr.bf16.mxu0 %v353
    %886 = vmatmul.mubr.bf16.gmra.mxu0 %v352
    %v887 = vpop.f32.mrf.mxu0
    %v888 = vadd.f32 0.0, %v887
    %v889 = vpop.f32.mrf.mxu0
    %v890 = vadd.f32 0.0, %v889
    %v891 = vpop.f32.mrf.mxu0
    %v892 = vadd.f32 0.0, %v891
    %v893 = vpop.f32.mrf.mxu0
    %v894 = vadd.f32 0.0, %v893
    %895 = vmatprep.mubr.bf16.mxu0 %v357
    %896 = vmatmul.mubr.bf16.gmra.mxu0 %v356
    %v897 = vpop.f32.mrf.mxu0
    %v898 = vadd.f32 0.0, %v897
    %v899 = vpop.f32.mrf.mxu0
    %v900 = vadd.f32 0.0, %v899
    %v901 = vpop.f32.mrf.mxu0
    %v902 = vadd.f32 0.0, %v901
    %v903 = vpop.f32.mrf.mxu0
    %v904 = vadd.f32 0.0, %v903
    %905 = vmatprep.mubr.bf16.mxu0 %v361
    %906 = vmatmul.mubr.bf16.gmra.mxu0 %v360
    %v907 = vpop.f32.mrf.mxu0
    %v908 = vadd.f32 0.0, %v907
    %v909 = vpop.f32.mrf.mxu0
    %v910 = vadd.f32 0.0, %v909
    %v911 = vpop.f32.mrf.mxu0
    %v912 = vadd.f32 0.0, %v911
    %v913 = vpop.f32.mrf.mxu0
    %v914 = vadd.f32 0.0, %v913
    %915 = vmatprep.mubr.bf16.mxu0 %v365
    %916 = vmatmul.mubr.bf16.gmra.mxu0 %v364
    %v917 = vpop.f32.mrf.mxu0
    %v918 = vadd.f32 0.0, %v917
    %v919 = vpop.f32.mrf.mxu0
    %v920 = vadd.f32 0.0, %v919
    %v921 = vpop.f32.mrf.mxu0
    %v922 = vadd.f32 0.0, %v921
    %v923 = vpop.f32.mrf.mxu0
    %v924 = vadd.f32 0.0, %v923
    %925 = vdwg.mxu0
    %926 = vmatprep.subr.bf16.mxu0 %v637
    %927 = vmatpush1.bf16.msra.mxu0 %v636
    %928 = vmatprep.subr.bf16.mxu0 %v635
    %929 = vmatpush1.bf16.msra.mxu0 %v634
    %930 = vmatprep.subr.bf16.mxu0 %v633
    %931 = vmatpush1.bf16.msra.mxu0 %v632
    %932 = vmatprep.subr.bf16.mxu0 %v631
    %933 = vmatpush1.bf16.msra.mxu0 %v630
    %934 = vmatprep.subr.bf16.mxu0 %v629
    %935 = vmatpush1.bf16.msra.mxu0 %v628
    %936 = vmatprep.subr.bf16.mxu0 %v627
    %937 = vmatpush1.bf16.msra.mxu0 %v626
    %938 = vmatprep.subr.bf16.mxu0 %v625
    %939 = vmatpush1.bf16.msra.mxu0 %v624
    %940 = vmatprep.subr.bf16.mxu0 %v623
    %941 = vmatpush1.bf16.msra.mxu0 %v622
    %942 = vmatprep.subr.bf16.mxu0 0
    %943 = vmatpush2.bf16.msra.mxu0 0
    %944 = vmatprep.subr.bf16.mxu0 0
    %945 = vmatpush2.bf16.msra.mxu0 0
    %946 = vmatprep.subr.bf16.mxu0 %v649
    %947 = vmatpush2.bf16.msra.mxu0 %v648
    %948 = vmatprep.subr.bf16.mxu0 %v647
    %949 = vmatpush2.bf16.msra.mxu0 %v646
    %950 = vmatprep.subr.bf16.mxu0 %v645
    %951 = vmatpush2.bf16.msra.mxu0 %v644
    %952 = vmatprep.subr.bf16.mxu0 %v643
    %953 = vmatpush2.bf16.msra.mxu0 %v642
    %954 = vmatprep.subr.bf16.mxu0 %v641
    %955 = vmatpush2.bf16.msra.mxu0 %v640
    %956 = vmatprep.subr.bf16.mxu0 %v639
    %957 = vmatpush2.bf16.msra.mxu0 %v638
    %958 = vmatprep.mubr.bf16.mxu0 %v712
    %959 = vmatmul.mubr.bf16.gmra.mxu0 %v314
    %v960 = vpop.f32.mrf.mxu0
    %v961 = vadd.f32 %v788, %v960
    %v962 = vpop.f32.mrf.mxu0
    %v963 = vadd.f32 %v790, %v962
    %v964 = vpop.f32.mrf.mxu0
    %v965 = vadd.f32 %v792, %v964
    %v966 = vpop.f32.mrf.mxu0
    %v967 = vadd.f32 %v794, %v966
    %968 = vmatprep.mubr.bf16.mxu0 %v715
    %969 = vmatmul.mubr.bf16.gmra.mxu0 %v318
    %v970 = vpop.f32.mrf.mxu0
    %v971 = vadd.f32 %v798, %v970
    %v972 = vpop.f32.mrf.mxu0
    %v973 = vadd.f32 %v800, %v972
    %v974 = vpop.f32.mrf.mxu0
    %v975 = vadd.f32 %v802, %v974
    %v976 = vpop.f32.mrf.mxu0
    %v977 = vadd.f32 %v804, %v976
    %978 = vmatprep.mubr.bf16.mxu0 %v718
    %979 = vmatmul.mubr.bf16.gmra.mxu0 %v322
    %v980 = vpop.f32.mrf.mxu0
    %v981 = vadd.f32 %v808, %v980
    %v982 = vpop.f32.mrf.mxu0
    %v983 = vadd.f32 %v810, %v982
    %v984 = vpop.f32.mrf.mxu0
    %v985 = vadd.f32 %v812, %v984
    %v986 = vpop.f32.mrf.mxu0
    %v987 = vadd.f32 %v814, %v986
    %988 = vmatprep.mubr.bf16.mxu0 %v721
    %989 = vmatmul.mubr.bf16.gmra.mxu0 %v326
    %v990 = vpop.f32.mrf.mxu0
    %v991 = vadd.f32 %v818, %v990
    %v992 = vpop.f32.mrf.mxu0
    %v993 = vadd.f32 %v820, %v992
    %v994 = vpop.f32.mrf.mxu0
    %v995 = vadd.f32 %v822, %v994
    %v996 = vpop.f32.mrf.mxu0
    %v997 = vadd.f32 %v824, %v996
    %998 = vmatprep.mubr.bf16.mxu0 %v724
    %999 = vmatmul.mubr.bf16.gmra.mxu0 %v330
    %v1000 = vpop.f32.mrf.mxu0
    %v1001 = vadd.f32 %v828, %v1000
    %v1002 = vpop.f32.mrf.mxu0
    %v1003 = vadd.f32 %v830, %v1002
    %v1004 = vpop.f32.mrf.mxu0
    %v1005 = vadd.f32 %v832, %v1004
    %v1006 = vpop.f32.mrf.mxu0
    %v1007 = vadd.f32 %v834, %v1006
    %1008 = vmatprep.mubr.bf16.mxu0 %v727
    %1009 = vmatmul.mubr.bf16.gmra.mxu0 %v334
    %v1010 = vpop.f32.mrf.mxu0
    %v1011 = vadd.f32 %v838, %v1010
    %v1012 = vpop.f32.mrf.mxu0
    %v1013 = vadd.f32 %v840, %v1012
    %v1014 = vpop.f32.mrf.mxu0
    %v1015 = vadd.f32 %v842, %v1014
    %v1016 = vpop.f32.mrf.mxu0
    %v1017 = vadd.f32 %v844, %v1016
    %1018 = vmatprep.mubr.bf16.mxu0 %v730
    %1019 = vmatmul.mubr.bf16.gmra.mxu0 %v338
    %v1020 = vpop.f32.mrf.mxu0
    %v1021 = vadd.f32 %v848, %v1020
    %v1022 = vpop.f32.mrf.mxu0
    %v1023 = vadd.f32 %v850, %v1022
    %v1024 = vpop.f32.mrf.mxu0
    %v1025 = vadd.f32 %v852, %v1024
    %v1026 = vpop.f32.mrf.mxu0
    %v1027 = vadd.f32 %v854, %v1026
    %1028 = vmatprep.mubr.bf16.mxu0 %v733
    %1029 = vmatmul.mubr.bf16.gmra.mxu0 %v342
    %v1030 = vpop.f32.mrf.mxu0
    %v1031 = vadd.f32 %v858, %v1030
    %v1032 = vpop.f32.mrf.mxu0
    %v1033 = vadd.f32 %v860, %v1032
    %v1034 = vpop.f32.mrf.mxu0
    %v1035 = vadd.f32 %v862, %v1034
    %v1036 = vpop.f32.mrf.mxu0
    %v1037 = vadd.f32 %v864, %v1036
    %1038 = vmatprep.mubr.bf16.mxu0 %v736
    %1039 = vmatmul.mubr.bf16.gmra.mxu0 %v346
    %v1040 = vpop.f32.mrf.mxu0
    %v1041 = vadd.f32 %v868, %v1040
    %v1042 = vpop.f32.mrf.mxu0
    %v1043 = vadd.f32 %v870, %v1042
    %v1044 = vpop.f32.mrf.mxu0
    %v1045 = vadd.f32 %v872, %v1044
    %v1046 = vpop.f32.mrf.mxu0
    %v1047 = vadd.f32 %v874, %v1046
    %1048 = vmatprep.mubr.bf16.mxu0 %v739
    %1049 = vmatmul.mubr.bf16.gmra.mxu0 %v350
    %v1050 = vpop.f32.mrf.mxu0
    %v1051 = vadd.f32 %v878, %v1050
    %v1052 = vpop.f32.mrf.mxu0
    %v1053 = vadd.f32 %v880, %v1052
    %v1054 = vpop.f32.mrf.mxu0
    %v1055 = vadd.f32 %v882, %v1054
    %v1056 = vpop.f32.mrf.mxu0
    %v1057 = vadd.f32 %v884, %v1056
    %1058 = vmatprep.mubr.bf16.mxu0 %v742
    %1059 = vmatmul.mubr.bf16.gmra.mxu0 %v354
    %v1060 = vpop.f32.mrf.mxu0
    %v1061 = vadd.f32 %v888, %v1060
    %v1062 = vpop.f32.mrf.mxu0
    %v1063 = vadd.f32 %v890, %v1062
    %v1064 = vpop.f32.mrf.mxu0
    %v1065 = vadd.f32 %v892, %v1064
    %v1066 = vpop.f32.mrf.mxu0
    %v1067 = vadd.f32 %v894, %v1066
    %1068 = vmatprep.mubr.bf16.mxu0 %v745
    %1069 = vmatmul.mubr.bf16.gmra.mxu0 %v358
    %v1070 = vpop.f32.mrf.mxu0
    %v1071 = vadd.f32 %v898, %v1070
    %v1072 = vpop.f32.mrf.mxu0
    %v1073 = vadd.f32 %v900, %v1072
    %v1074 = vpop.f32.mrf.mxu0
    %v1075 = vadd.f32 %v902, %v1074
    %v1076 = vpop.f32.mrf.mxu0
    %v1077 = vadd.f32 %v904, %v1076
    %1078 = vmatprep.mubr.bf16.mxu0 %v748
    %1079 = vmatmul.mubr.bf16.gmra.mxu0 %v362
    %v1080 = vpop.f32.mrf.mxu0
    %v1081 = vadd.f32 %v908, %v1080
    %v1082 = vpop.f32.mrf.mxu0
    %v1083 = vadd.f32 %v910, %v1082
    %v1084 = vpop.f32.mrf.mxu0
    %v1085 = vadd.f32 %v912, %v1084
    %v1086 = vpop.f32.mrf.mxu0
    %v1087 = vadd.f32 %v914, %v1086
    %1088 = vmatprep.mubr.bf16.mxu0 %v751
    %1089 = vmatmul.mubr.bf16.gmra.mxu0 %v366
    %v1090 = vpop.f32.mrf.mxu0
    %v1091 = vadd.f32 %v918, %v1090
    %v1092 = vpop.f32.mrf.mxu0
    %v1093 = vadd.f32 %v920, %v1092
    %v1094 = vpop.f32.mrf.mxu0
    %v1095 = vadd.f32 %v922, %v1094
    %v1096 = vpop.f32.mrf.mxu0
    %v1097 = vadd.f32 %v924, %v1096
    %1098 = vdwg.mxu0
    %v1099 = vmax.f32 %v961, %v1031
    %v1100 = vmax.f32 %v963, %v1033
    %v1101 = vmax.f32 %v965, %v1035
    %v1102 = vmax.f32 %v967, %v1037
    %v1103 = vmax.f32 %v971, %v1041
    %v1104 = vmax.f32 %v973, %v1043
    %v1105 = vmax.f32 %v975, %v1045
    %v1106 = vmax.f32 %v977, %v1047
    %v1107 = vmax.f32 %v981, %v1051
    %v1108 = vmax.f32 %v983, %v1053
    %v1109 = vmax.f32 %v985, %v1055
    %v1110 = vmax.f32 %v987, %v1057
    %v1111 = vmax.f32 %v991, %v1061
    %v1112 = vmax.f32 %v993, %v1063
    %v1113 = vmax.f32 %v995, %v1065
    %v1114 = vmax.f32 %v997, %v1067
    %v1115 = vmax.f32 %v1001, %v1071
    %v1116 = vmax.f32 %v1003, %v1073
    %v1117 = vmax.f32 %v1005, %v1075
    %v1118 = vmax.f32 %v1007, %v1077
    %v1119 = vmax.f32 %v1011, %v1081
    %v1120 = vmax.f32 %v1013, %v1083
    %v1121 = vmax.f32 %v1015, %v1085
    %v1122 = vmax.f32 %v1017, %v1087
    %v1123 = vmax.f32 %v1021, %v1091
    %v1124 = vmax.f32 %v1023, %v1093
    %v1125 = vmax.f32 %v1025, %v1095
    %v1126 = vmax.f32 %v1027, %v1097
    %v1127 = vmax.f32 %v1099, %v1100
    %v1128 = vmax.f32 %v1101, %v1102
    %v1129 = vmax.f32 %v1103, %v1104
    %v1130 = vmax.f32 %v1105, %v1106
    %v1131 = vmax.f32 %v1107, %v1108
    %v1132 = vmax.f32 %v1109, %v1110
    %v1133 = vmax.f32 %v1111, %v1112
    %v1134 = vmax.f32 %v1113, %v1114
    %v1135 = vmax.f32 %v1115, %v1116
    %v1136 = vmax.f32 %v1117, %v1118
    %v1137 = vmax.f32 %v1119, %v1120
    %v1138 = vmax.f32 %v1121, %v1122
    %v1139 = vmax.f32 %v1123, %v1124
    %v1140 = vmax.f32 %v1125, %v1126
    %v1141 = vld [vmem:[%s6] sm:$0x1]
    %v1142 = vlaneseq
    %v1143 = vshrl.u32 %v1142, 7
    %v1144 = vsub.s32 0, %v1143
    %v1145 = vrot.slane %v1141, %v1144
    %v1146 = vadd.f32 %v1127, %v1145
    %v1147 = vadd.f32 %v1128, %v1145
    %v1148 = vadd.f32 %v1129, %v1145
    %v1149 = vadd.f32 %v1130, %v1145
    %v1150 = vadd.f32 %v1131, %v1145
    %v1151 = vadd.f32 %v1132, %v1145
    %v1152 = vadd.f32 %v1133, %v1145
    %v1153 = vadd.f32 %v1134, %v1145
    %v1154 = vadd.f32 %v1135, %v1145
    %v1155 = vadd.f32 %v1136, %v1145
    %v1156 = vadd.f32 %v1137, %v1145
    %v1157 = vadd.f32 %v1138, %v1145
    %v1158 = vadd.f32 %v1139, %v1145
    %v1159 = vadd.f32 %v1140, %v1145
    %v1160 = vmax.f32 %v1146, 0.0
    %v1161 = vmax.f32 %v1147, 0.0
    %v1162 = vmax.f32 %v1148, 0.0
    %v1163 = vmax.f32 %v1149, 0.0
    %v1164 = vmax.f32 %v1150, 0.0
    %v1165 = vmax.f32 %v1151, 0.0
    %v1166 = vmax.f32 %v1152, 0.0
    %v1167 = vmax.f32 %v1153, 0.0
    %v1168 = vmax.f32 %v1154, 0.0
    %v1169 = vmax.f32 %v1155, 0.0
    %v1170 = vmax.f32 %v1156, 0.0
    %v1171 = vmax.f32 %v1157, 0.0
    %v1172 = vmax.f32 %v1158, 0.0
    %v1173 = vmax.f32 %v1159, 0.0
    %v1174 = vpack.c.bf16 %v1161, %v1160
    %v1175 = vpack.c.bf16 %v1163, %v1162
    %v1176 = vpack.c.bf16 %v1165, %v1164
    %v1177 = vpack.c.bf16 %v1167, %v1166
    %v1178 = vpack.c.bf16 %v1169, %v1168
    %v1179 = vpack.c.bf16 %v1171, %v1170
    %v1180 = vpack.c.bf16 %v1173, %v1172
    %v1181 = vld [vmem:[%s2] sm:$0xff]
    %v1182 = vld [vmem:[%s2 + $0x8] sm:$0xff]
    %v1183 = vld [vmem:[%s2 + $0x10] sm:$0xff]
    %v1184 = vld [vmem:[%s2 + $0x18] sm:$0xff]
    %v1185 = vld [vmem:[%s2 + $0x20] sm:$0xff]
    %v1186 = vld [vmem:[%s2 + $0x28] sm:$0xff]
    %v1187 = vld [vmem:[%s2 + $0x30] sm:$0xff]
    %v1188 = vld [vmem:[%s2 + $0x38] sm:$0xff]
    %v1189 = vld [vmem:[%s2 + $0x40] sm:$0xff]
    %v1190 = vld [vmem:[%s2 + $0x48] sm:$0xff]
    %v1191 = vld [vmem:[%s2 + $0x50] sm:$0xff]
    %v1192 = vld [vmem:[%s2 + $0x58] sm:$0xff]
    %v1193 = vld [vmem:[%s2 + $0x60] sm:$0xff]
    %v1194 = vld [vmem:[%s2 + $0x68] sm:$0xff]
    %v1195 = vld [vmem:[%s2 + $0x70] sm:$0xff]
    %v1196 = vld [vmem:[%s2 + $0x78] sm:$0xff]
    %v1197 = vld [vmem:[%s2 + $0x80] sm:$0xff]
    %v1198 = vld [vmem:[%s2 + $0x88] sm:$0xff]
    %v1199 = vld [vmem:[%s2 + $0x90] sm:$0xff]
    %v1200 = vld [vmem:[%s2 + $0x98] sm:$0xff]
    %v1201 = vld [vmem:[%s2 + $0xa0] sm:$0xff]
    %v1202 = vld [vmem:[%s2 + $0xa8] sm:$0xff]
    %v1203 = vld [vmem:[%s2 + $0xb0] sm:$0xff]
    %v1204 = vld [vmem:[%s2 + $0xb8] sm:$0xff]
    %v1205 = vld [vmem:[%s2 + $0xc0] sm:$0xff]
    %v1206 = vld [vmem:[%s2 + $0xc8] sm:$0xff]
    %v1207 = vld [vmem:[%s2 + $0xd0] sm:$0xff]
    %v1208 = vld [vmem:[%s2 + $0xd8] sm:$0xff]
    %v1209 = vld [vmem:[%s2 + $0xe0] sm:$0xff]
    %v1210 = vld [vmem:[%s2 + $0xe8] sm:$0xff]
    %v1211 = vld [vmem:[%s2 + $0xf0] sm:$0xff]
    %v1212 = vld [vmem:[%s2 + $0xf8] sm:$0xff]
    %vm1216 = vcmask 1043456
    %v1217 = vrot.slane %v1177, 4
    %v1218 = vrot.slane %v1178, 4
    %v1219 = vsel %vm1216, %v1217, %v1218
    %v1220 = vrot.slane %v1179, 4
    %v1221 = vsel %vm1216, %v1218, %v1220
    %v1241 = vunpack.c.l.b16 %v1197
    %v1242 = vunpack.c.h.b16 %v1197
    %v1243 = vunpack.c.l.b16 %v1198
    %v1244 = vunpack.c.h.b16 %v1198
    %v1245 = vunpack.c.l.b16 %v1199
    %v1246 = vunpack.c.h.b16 %v1199
    %v1247 = vunpack.c.l.b16 %v1200
    %v1248 = vunpack.c.h.b16 %v1200
    %v1249 = vunpack.c.l.b16 %v1201
    %v1250 = vunpack.c.h.b16 %v1201
    %v1251 = vunpack.c.l.b16 %v1202
    %v1252 = vunpack.c.h.b16 %v1202
    %v1253 = vunpack.c.l.b16 %v1203
    %v1254 = vunpack.c.h.b16 %v1203
    %v1255 = vunpack.c.l.b16 %v1204
    %v1256 = vunpack.c.h.b16 %v1204
    %v1257 = vunpack.c.l.b16 %v1205
    %v1258 = vunpack.c.h.b16 %v1205
    %v1259 = vunpack.c.l.b16 %v1206
    %v1260 = vunpack.c.h.b16 %v1206
    %v1261 = vunpack.c.l.b16 %v1207
    %v1262 = vunpack.c.h.b16 %v1207
    %v1263 = vunpack.c.l.b16 %v1208
    %v1264 = vunpack.c.h.b16 %v1208
    %v1265 = vunpack.c.l.b16 %v1209
    %v1266 = vunpack.c.h.b16 %v1209
    %v1267 = vunpack.c.l.b16 %v1210
    %v1268 = vunpack.c.h.b16 %v1210
    %v1269 = vunpack.c.l.b16 %v1211
    %v1270 = vunpack.c.h.b16 %v1211
    %v1271 = vunpack.c.l.b16 %v1212
    %v1272 = vunpack.c.h.b16 %v1212
    %v1273 = vpack.c.b16 %v1243, %v1241
    %v1274 = vpack.c.b16 %v1244, %v1242
    %v1275 = vpack.c.b16 %v1247, %v1245
    %v1276 = vpack.c.b16 %v1248, %v1246
    %v1277 = vpack.c.b16 %v1251, %v1249
    %v1278 = vpack.c.b16 %v1252, %v1250
    %v1279 = vpack.c.b16 %v1255, %v1253
    %v1280 = vpack.c.b16 %v1256, %v1254
    %v1281 = vpack.c.b16 %v1259, %v1257
    %v1282 = vpack.c.b16 %v1260, %v1258
    %v1283 = vpack.c.b16 %v1263, %v1261
    %v1284 = vpack.c.b16 %v1264, %v1262
    %v1285 = vpack.c.b16 %v1267, %v1265
    %v1286 = vpack.c.b16 %v1268, %v1266
    %v1287 = vpack.c.b16 %v1271, %v1269
    %v1288 = vpack.c.b16 %v1272, %v1270
    %1305 = vmatprep.subr.bf16.mxu0 %v1288
    %1306 = vmatpush1.bf16.msra.mxu0 %v1287
    %1307 = vmatprep.subr.bf16.mxu0 %v1286
    %1308 = vmatpush1.bf16.msra.mxu0 %v1285
    %1309 = vmatprep.subr.bf16.mxu0 %v1284
    %1310 = vmatpush1.bf16.msra.mxu0 %v1283
    %1311 = vmatprep.subr.bf16.mxu0 %v1282
    %1312 = vmatpush1.bf16.msra.mxu0 %v1281
    %1313 = vmatprep.subr.bf16.mxu0 %v1280
    %1314 = vmatpush1.bf16.msra.mxu0 %v1279
    %1315 = vmatprep.subr.bf16.mxu0 %v1278
    %1316 = vmatpush1.bf16.msra.mxu0 %v1277
    %1317 = vmatprep.subr.bf16.mxu0 %v1276
    %1318 = vmatpush1.bf16.msra.mxu0 %v1275
    %1319 = vmatprep.subr.bf16.mxu0 %v1274
    %1320 = vmatpush1.bf16.msra.mxu0 %v1273
    %1321 = vmatprep.subr.bf16.mxu0 0
    %1322 = vmatpush2.bf16.msra.mxu0 0
    %1323 = vmatprep.subr.bf16.mxu0 0
    %1324 = vmatpush2.bf16.msra.mxu0 0
    %1325 = vmatprep.subr.bf16.mxu0 0
    %1326 = vmatpush2.bf16.msra.mxu0 0
    %1327 = vmatprep.subr.bf16.mxu0 0
    %1328 = vmatpush2.bf16.msra.mxu0 0
    %1329 = vmatprep.subr.bf16.mxu0 0
    %1330 = vmatpush2.bf16.msra.mxu0 0
    %1331 = vmatprep.subr.bf16.mxu0 0
    %1332 = vmatpush2.bf16.msra.mxu0 0
    %1333 = vmatprep.subr.bf16.mxu0 0
    %1334 = vmatpush2.bf16.msra.mxu0 0
    %1335 = vmatprep.subr.bf16.mxu0 0
    %1336 = vmatpush2.bf16.msra.mxu0 0
    %1337 = vmatprep.mubr.bf16.mxu0 0
    %1338 = vmatmul.mubr.bf16.gmra.mxu0 %v1219
    %v1339 = vpop.f32.mrf.mxu0
    %v1340 = vadd.f32 0.0, %v1339
    %v1341 = vpop.f32.mrf.mxu0
    %v1342 = vadd.f32 0.0, %v1341
    %v1343 = vpop.f32.mrf.mxu0
    %v1344 = vadd.f32 0.0, %v1343
    %v1345 = vpop.f32.mrf.mxu0
    %v1346 = vadd.f32 0.0, %v1345
    %1347 = vmatprep.mubr.bf16.mxu0 0
    %1348 = vmatmul.mubr.bf16.gmra.mxu0 %v1221
    %v1349 = vpop.f32.mrf.mxu0
    %v1350 = vadd.f32 0.0, %v1349
    %v1351 = vpop.f32.mrf.mxu0
    %v1352 = vadd.f32 0.0, %v1351
    %v1353 = vpop.f32.mrf.mxu0
    %v1354 = vadd.f32 0.0, %v1353
    %v1355 = vpop.f32.mrf.mxu0
    %v1356 = vadd.f32 0.0, %v1355
    %1357 = vmatprep.mubr.bf16.mxu0 0
    %1358 = vmatmul.mubr.bf16.gmra.mxu0 %v1220
    %v1359 = vpop.f32.mrf.mxu0
    %v1360 = vadd.f32 0.0, %v1359
    %v1361 = vpop.f32.mrf.mxu0
    %v1362 = vadd.f32 0.0, %v1361
    %v1363 = vpop.f32.mrf.mxu0
    %v1364 = vpop.f32.mrf.mxu0
    %1365 = vdwg.mxu0
    %v1382 = vunpack.c.l.b16 %v1181
    %v1383 = vunpack.c.h.b16 %v1181
    %v1384 = vunpack.c.l.b16 %v1182
    %v1385 = vunpack.c.h.b16 %v1182
    %v1386 = vunpack.c.l.b16 %v1183
    %v1387 = vunpack.c.h.b16 %v1183
    %v1388 = vunpack.c.l.b16 %v1184
    %v1389 = vunpack.c.h.b16 %v1184
    %v1390 = vunpack.c.l.b16 %v1185
    %v1391 = vunpack.c.h.b16 %v1185
    %v1392 = vunpack.c.l.b16 %v1186
    %v1393 = vunpack.c.h.b16 %v1186
    %v1394 = vunpack.c.l.b16 %v1187
    %v1395 = vunpack.c.h.b16 %v1187
    %v1396 = vunpack.c.l.b16 %v1188
    %v1397 = vunpack.c.h.b16 %v1188
    %v1398 = vunpack.c.l.b16 %v1189
    %v1399 = vunpack.c.h.b16 %v1189
    %v1400 = vunpack.c.l.b16 %v1190
    %v1401 = vunpack.c.h.b16 %v1190
    %v1402 = vunpack.c.l.b16 %v1191
    %v1403 = vunpack.c.h.b16 %v1191
    %v1404 = vunpack.c.l.b16 %v1192
    %v1405 = vunpack.c.h.b16 %v1192
    %v1406 = vunpack.c.l.b16 %v1193
    %v1407 = vunpack.c.h.b16 %v1193
    %v1408 = vunpack.c.l.b16 %v1194
    %v1409 = vunpack.c.h.b16 %v1194
    %v1410 = vunpack.c.l.b16 %v1195
    %v1411 = vunpack.c.h.b16 %v1195
    %v1412 = vunpack.c.l.b16 %v1196
    %v1413 = vunpack.c.h.b16 %v1196
    %v1414 = vpack.c.b16 %v1384, %v1382
    %v1415 = vpack.c.b16 %v1385, %v1383
    %v1416 = vpack.c.b16 %v1388, %v1386
    %v1417 = vpack.c.b16 %v1389, %v1387
    %v1418 = vpack.c.b16 %v1392, %v1390
    %v1419 = vpack.c.b16 %v1393, %v1391
    %v1420 = vpack.c.b16 %v1396, %v1394
    %v1421 = vpack.c.b16 %v1397, %v1395
    %v1422 = vpack.c.b16 %v1400, %v1398
    %v1423 = vpack.c.b16 %v1401, %v1399
    %v1424 = vpack.c.b16 %v1404, %v1402
    %v1425 = vpack.c.b16 %v1405, %v1403
    %v1426 = vpack.c.b16 %v1408, %v1406
    %v1427 = vpack.c.b16 %v1409, %v1407
    %v1428 = vpack.c.b16 %v1412, %v1410
    %v1429 = vpack.c.b16 %v1413, %v1411
    %1446 = vmatprep.subr.bf16.mxu0 %v1429
    %1447 = vmatpush1.bf16.msra.mxu0 %v1428
    %1448 = vmatprep.subr.bf16.mxu0 %v1427
    %1449 = vmatpush1.bf16.msra.mxu0 %v1426
    %1450 = vmatprep.subr.bf16.mxu0 %v1425
    %1451 = vmatpush1.bf16.msra.mxu0 %v1424
    %1452 = vmatprep.subr.bf16.mxu0 %v1423
    %1453 = vmatpush1.bf16.msra.mxu0 %v1422
    %1454 = vmatprep.subr.bf16.mxu0 %v1421
    %1455 = vmatpush1.bf16.msra.mxu0 %v1420
    %1456 = vmatprep.subr.bf16.mxu0 %v1419
    %1457 = vmatpush1.bf16.msra.mxu0 %v1418
    %1458 = vmatprep.subr.bf16.mxu0 %v1417
    %1459 = vmatpush1.bf16.msra.mxu0 %v1416
    %1460 = vmatprep.subr.bf16.mxu0 %v1415
    %1461 = vmatpush1.bf16.msra.mxu0 %v1414
    %1462 = vmatprep.subr.bf16.mxu0 0
    %1463 = vmatpush2.bf16.msra.mxu0 0
    %1464 = vmatprep.subr.bf16.mxu0 0
    %1465 = vmatpush2.bf16.msra.mxu0 0
    %1466 = vmatprep.subr.bf16.mxu0 0
    %1467 = vmatpush2.bf16.msra.mxu0 0
    %1468 = vmatprep.subr.bf16.mxu0 0
    %1469 = vmatpush2.bf16.msra.mxu0 0
    %1470 = vmatprep.subr.bf16.mxu0 0
    %1471 = vmatpush2.bf16.msra.mxu0 0
    %1472 = vmatprep.subr.bf16.mxu0 0
    %1473 = vmatpush2.bf16.msra.mxu0 0
    %1474 = vmatprep.subr.bf16.mxu0 0
    %1475 = vmatpush2.bf16.msra.mxu0 0
    %1476 = vmatprep.subr.bf16.mxu0 0
    %1477 = vmatpush2.bf16.msra.mxu0 0
    %1478 = vmatprep.mubr.bf16.mxu0 0
    %1479 = vmatmul.mubr.bf16.gmra.mxu0 %v1174
    %v1480 = vpop.f32.mrf.mxu0
    %v1481 = vadd.f32 %v1340, %v1480
    %v1482 = vpop.f32.mrf.mxu0
    %v1483 = vadd.f32 %v1342, %v1482
    %v1484 = vpop.f32.mrf.mxu0
    %v1485 = vadd.f32 %v1344, %v1484
    %v1486 = vpop.f32.mrf.mxu0
    %v1487 = vadd.f32 %v1346, %v1486
    %1488 = vmatprep.mubr.bf16.mxu0 0
    %1489 = vmatmul.mubr.bf16.gmra.mxu0 %v1175
    %v1490 = vpop.f32.mrf.mxu0
    %v1491 = vadd.f32 %v1350, %v1490
    %v1492 = vpop.f32.mrf.mxu0
    %v1493 = vadd.f32 %v1352, %v1492
    %v1494 = vpop.f32.mrf.mxu0
    %v1495 = vadd.f32 %v1354, %v1494
    %v1496 = vpop.f32.mrf.mxu0
    %v1497 = vadd.f32 %v1356, %v1496
    %1498 = vmatprep.mubr.bf16.mxu0 0
    %1499 = vmatmul.mubr.bf16.gmra.mxu0 %v1176
    %v1500 = vpop.f32.mrf.mxu0
    %v1501 = vadd.f32 %v1360, %v1500
    %v1502 = vpop.f32.mrf.mxu0
    %v1503 = vadd.f32 %v1362, %v1502
    %v1504 = vpop.f32.mrf.mxu0
    %v1505 = vpop.f32.mrf.mxu0
    %1506 = vdwg.mxu0
    %v1507 = vld [vmem:[%s2 + $0x100] sm:$0xff]
    %v1508 = vld [vmem:[%s2 + $0x108] sm:$0xff]
    %v1509 = vld [vmem:[%s2 + $0x110] sm:$0xff]
    %v1510 = vld [vmem:[%s2 + $0x118] sm:$0xff]
    %v1511 = vld [vmem:[%s2 + $0x120] sm:$0xff]
    %v1512 = vld [vmem:[%s2 + $0x128] sm:$0xff]
    %v1513 = vld [vmem:[%s2 + $0x130] sm:$0xff]
    %v1514 = vld [vmem:[%s2 + $0x138] sm:$0xff]
    %v1515 = vld [vmem:[%s2 + $0x140] sm:$0xff]
    %v1516 = vld [vmem:[%s2 + $0x148] sm:$0xff]
    %v1517 = vld [vmem:[%s2 + $0x150] sm:$0xff]
    %v1518 = vld [vmem:[%s2 + $0x158] sm:$0xff]
    %v1519 = vld [vmem:[%s2 + $0x160] sm:$0xff]
    %v1520 = vld [vmem:[%s2 + $0x168] sm:$0xff]
    %v1521 = vld [vmem:[%s2 + $0x170] sm:$0xff]
    %v1522 = vld [vmem:[%s2 + $0x178] sm:$0xff]
    %v1526 = vrot.slane %v1174, 4
    %v1527 = vrot.slane %v1175, 4
    %v1528 = vsel %vm1216, %v1526, %v1527
    %v1529 = vrot.slane %v1176, 4
    %v1530 = vsel %vm1216, %v1527, %v1529
    %v1550 = vunpack.c.l.b16 %v1507
    %v1551 = vunpack.c.h.b16 %v1507
    %v1552 = vunpack.c.l.b16 %v1508
    %v1553 = vunpack.c.h.b16 %v1508
    %v1554 = vunpack.c.l.b16 %v1509
    %v1555 = vunpack.c.h.b16 %v1509
    %v1556 = vunpack.c.l.b16 %v1510
    %v1557 = vunpack.c.h.b16 %v1510
    %v1558 = vunpack.c.l.b16 %v1511
    %v1559 = vunpack.c.h.b16 %v1511
    %v1560 = vunpack.c.l.b16 %v1512
    %v1561 = vunpack.c.h.b16 %v1512
    %v1562 = vunpack.c.l.b16 %v1513
    %v1563 = vunpack.c.h.b16 %v1513
    %v1564 = vunpack.c.l.b16 %v1514
    %v1565 = vunpack.c.h.b16 %v1514
    %v1566 = vunpack.c.l.b16 %v1515
    %v1567 = vunpack.c.h.b16 %v1515
    %v1568 = vunpack.c.l.b16 %v1516
    %v1569 = vunpack.c.h.b16 %v1516
    %v1570 = vunpack.c.l.b16 %v1517
    %v1571 = vunpack.c.h.b16 %v1517
    %v1572 = vunpack.c.l.b16 %v1518
    %v1573 = vunpack.c.h.b16 %v1518
    %v1574 = vunpack.c.l.b16 %v1519
    %v1575 = vunpack.c.h.b16 %v1519
    %v1576 = vunpack.c.l.b16 %v1520
    %v1577 = vunpack.c.h.b16 %v1520
    %v1578 = vunpack.c.l.b16 %v1521
    %v1579 = vunpack.c.h.b16 %v1521
    %v1580 = vunpack.c.l.b16 %v1522
    %v1581 = vunpack.c.h.b16 %v1522
    %v1582 = vpack.c.b16 %v1552, %v1550
    %v1583 = vpack.c.b16 %v1553, %v1551
    %v1584 = vpack.c.b16 %v1556, %v1554
    %v1585 = vpack.c.b16 %v1557, %v1555
    %v1586 = vpack.c.b16 %v1560, %v1558
    %v1587 = vpack.c.b16 %v1561, %v1559
    %v1588 = vpack.c.b16 %v1564, %v1562
    %v1589 = vpack.c.b16 %v1565, %v1563
    %v1590 = vpack.c.b16 %v1568, %v1566
    %v1591 = vpack.c.b16 %v1569, %v1567
    %v1592 = vpack.c.b16 %v1572, %v1570
    %v1593 = vpack.c.b16 %v1573, %v1571
    %v1594 = vpack.c.b16 %v1576, %v1574
    %v1595 = vpack.c.b16 %v1577, %v1575
    %v1596 = vpack.c.b16 %v1580, %v1578
    %v1597 = vpack.c.b16 %v1581, %v1579
    %1614 = vmatprep.subr.bf16.mxu0 %v1597
    %1615 = vmatpush1.bf16.msra.mxu0 %v1596
    %1616 = vmatprep.subr.bf16.mxu0 %v1595
    %1617 = vmatpush1.bf16.msra.mxu0 %v1594
    %1618 = vmatprep.subr.bf16.mxu0 %v1593
    %1619 = vmatpush1.bf16.msra.mxu0 %v1592
    %1620 = vmatprep.subr.bf16.mxu0 %v1591
    %1621 = vmatpush1.bf16.msra.mxu0 %v1590
    %1622 = vmatprep.subr.bf16.mxu0 %v1589
    %1623 = vmatpush1.bf16.msra.mxu0 %v1588
    %1624 = vmatprep.subr.bf16.mxu0 %v1587
    %1625 = vmatpush1.bf16.msra.mxu0 %v1586
    %1626 = vmatprep.subr.bf16.mxu0 %v1585
    %1627 = vmatpush1.bf16.msra.mxu0 %v1584
    %1628 = vmatprep.subr.bf16.mxu0 %v1583
    %1629 = vmatpush1.bf16.msra.mxu0 %v1582
    %1630 = vmatprep.subr.bf16.mxu0 0
    %1631 = vmatpush2.bf16.msra.mxu0 0
    %1632 = vmatprep.subr.bf16.mxu0 0
    %1633 = vmatpush2.bf16.msra.mxu0 0
    %1634 = vmatprep.subr.bf16.mxu0 0
    %1635 = vmatpush2.bf16.msra.mxu0 0
    %1636 = vmatprep.subr.bf16.mxu0 0
    %1637 = vmatpush2.bf16.msra.mxu0 0
    %1638 = vmatprep.subr.bf16.mxu0 0
    %1639 = vmatpush2.bf16.msra.mxu0 0
    %1640 = vmatprep.subr.bf16.mxu0 0
    %1641 = vmatpush2.bf16.msra.mxu0 0
    %1642 = vmatprep.subr.bf16.mxu0 0
    %1643 = vmatpush2.bf16.msra.mxu0 0
    %1644 = vmatprep.subr.bf16.mxu0 0
    %1645 = vmatpush2.bf16.msra.mxu0 0
    %1646 = vmatprep.mubr.bf16.mxu0 0
    %1647 = vmatmul.mubr.bf16.gmra.mxu0 %v1528
    %v1648 = vpop.f32.mrf.mxu0
    %v1649 = vadd.f32 0.0, %v1648
    %v1650 = vpop.f32.mrf.mxu0
    %v1651 = vadd.f32 0.0, %v1650
    %v1652 = vpop.f32.mrf.mxu0
    %v1653 = vadd.f32 0.0, %v1652
    %v1654 = vpop.f32.mrf.mxu0
    %v1655 = vadd.f32 0.0, %v1654
    %1656 = vmatprep.mubr.bf16.mxu0 0
    %1657 = vmatmul.mubr.bf16.gmra.mxu0 %v1530
    %v1658 = vpop.f32.mrf.mxu0
    %v1659 = vadd.f32 0.0, %v1658
    %v1660 = vpop.f32.mrf.mxu0
    %v1661 = vadd.f32 0.0, %v1660
    %v1662 = vpop.f32.mrf.mxu0
    %v1663 = vadd.f32 0.0, %v1662
    %v1664 = vpop.f32.mrf.mxu0
    %v1665 = vadd.f32 0.0, %v1664
    %1666 = vmatprep.mubr.bf16.mxu0 0
    %1667 = vmatmul.mubr.bf16.gmra.mxu0 %v1529
    %v1668 = vpop.f32.mrf.mxu0
    %v1669 = vadd.f32 0.0, %v1668
    %v1670 = vpop.f32.mrf.mxu0
    %v1671 = vadd.f32 0.0, %v1670
    %v1672 = vpop.f32.mrf.mxu0
    %v1673 = vpop.f32.mrf.mxu0
    %1674 = vdwg.mxu0
    %v1675 = vadd.f32 %v1481, %v1649
    %v1676 = vadd.f32 %v1483, %v1651
    %v1677 = vadd.f32 %v1485, %v1653
    %v1678 = vadd.f32 %v1487, %v1655
    %v1679 = vadd.f32 %v1491, %v1659
    %v1680 = vadd.f32 %v1493, %v1661
    %v1681 = vadd.f32 %v1495, %v1663
    %v1682 = vadd.f32 %v1497, %v1665
    %v1683 = vadd.f32 %v1501, %v1669
    %v1684 = vadd.f32 %v1503, %v1671
    %v1685 = vld [vmem:[%s2 + $0x180] sm:$0xff]
    %v1686 = vld [vmem:[%s2 + $0x188] sm:$0xff]
    %v1687 = vld [vmem:[%s2 + $0x190] sm:$0xff]
    %v1688 = vld [vmem:[%s2 + $0x198] sm:$0xff]
    %v1689 = vld [vmem:[%s2 + $0x1a0] sm:$0xff]
    %v1690 = vld [vmem:[%s2 + $0x1a8] sm:$0xff]
    %v1691 = vld [vmem:[%s2 + $0x1b0] sm:$0xff]
    %v1692 = vld [vmem:[%s2 + $0x1b8] sm:$0xff]
    %v1693 = vld [vmem:[%s2 + $0x1c0] sm:$0xff]
    %v1694 = vld [vmem:[%s2 + $0x1c8] sm:$0xff]
    %v1695 = vld [vmem:[%s2 + $0x1d0] sm:$0xff]
    %v1696 = vld [vmem:[%s2 + $0x1d8] sm:$0xff]
    %v1697 = vld [vmem:[%s2 + $0x1e0] sm:$0xff]
    %v1698 = vld [vmem:[%s2 + $0x1e8] sm:$0xff]
    %v1699 = vld [vmem:[%s2 + $0x1f0] sm:$0xff]
    %v1700 = vld [vmem:[%s2 + $0x1f8] sm:$0xff]
    %v1717 = vunpack.c.l.b16 %v1685
    %v1718 = vunpack.c.h.b16 %v1685
    %v1719 = vunpack.c.l.b16 %v1686
    %v1720 = vunpack.c.h.b16 %v1686
    %v1721 = vunpack.c.l.b16 %v1687
    %v1722 = vunpack.c.h.b16 %v1687
    %v1723 = vunpack.c.l.b16 %v1688
    %v1724 = vunpack.c.h.b16 %v1688
    %v1725 = vunpack.c.l.b16 %v1689
    %v1726 = vunpack.c.h.b16 %v1689
    %v1727 = vunpack.c.l.b16 %v1690
    %v1728 = vunpack.c.h.b16 %v1690
    %v1729 = vunpack.c.l.b16 %v1691
    %v1730 = vunpack.c.h.b16 %v1691
    %v1731 = vunpack.c.l.b16 %v1692
    %v1732 = vunpack.c.h.b16 %v1692
    %v1733 = vunpack.c.l.b16 %v1693
    %v1734 = vunpack.c.h.b16 %v1693
    %v1735 = vunpack.c.l.b16 %v1694
    %v1736 = vunpack.c.h.b16 %v1694
    %v1737 = vunpack.c.l.b16 %v1695
    %v1738 = vunpack.c.h.b16 %v1695
    %v1739 = vunpack.c.l.b16 %v1696
    %v1740 = vunpack.c.h.b16 %v1696
    %v1741 = vunpack.c.l.b16 %v1697
    %v1742 = vunpack.c.h.b16 %v1697
    %v1743 = vunpack.c.l.b16 %v1698
    %v1744 = vunpack.c.h.b16 %v1698
    %v1745 = vunpack.c.l.b16 %v1699
    %v1746 = vunpack.c.h.b16 %v1699
    %v1747 = vunpack.c.l.b16 %v1700
    %v1748 = vunpack.c.h.b16 %v1700
    %v1749 = vpack.c.b16 %v1719, %v1717
    %v1750 = vpack.c.b16 %v1720, %v1718
    %v1751 = vpack.c.b16 %v1723, %v1721
    %v1752 = vpack.c.b16 %v1724, %v1722
    %v1753 = vpack.c.b16 %v1727, %v1725
    %v1754 = vpack.c.b16 %v1728, %v1726
    %v1755 = vpack.c.b16 %v1731, %v1729
    %v1756 = vpack.c.b16 %v1732, %v1730
    %v1757 = vpack.c.b16 %v1735, %v1733
    %v1758 = vpack.c.b16 %v1736, %v1734
    %v1759 = vpack.c.b16 %v1739, %v1737
    %v1760 = vpack.c.b16 %v1740, %v1738
    %v1761 = vpack.c.b16 %v1743, %v1741
    %v1762 = vpack.c.b16 %v1744, %v1742
    %v1763 = vpack.c.b16 %v1747, %v1745
    %v1764 = vpack.c.b16 %v1748, %v1746
    %1781 = vmatprep.subr.bf16.mxu0 %v1764
    %1782 = vmatpush1.bf16.msra.mxu0 %v1763
    %1783 = vmatprep.subr.bf16.mxu0 %v1762
    %1784 = vmatpush1.bf16.msra.mxu0 %v1761
    %1785 = vmatprep.subr.bf16.mxu0 %v1760
    %1786 = vmatpush1.bf16.msra.mxu0 %v1759
    %1787 = vmatprep.subr.bf16.mxu0 %v1758
    %1788 = vmatpush1.bf16.msra.mxu0 %v1757
    %1789 = vmatprep.subr.bf16.mxu0 %v1756
    %1790 = vmatpush1.bf16.msra.mxu0 %v1755
    %1791 = vmatprep.subr.bf16.mxu0 %v1754
    %1792 = vmatpush1.bf16.msra.mxu0 %v1753
    %1793 = vmatprep.subr.bf16.mxu0 %v1752
    %1794 = vmatpush1.bf16.msra.mxu0 %v1751
    %1795 = vmatprep.subr.bf16.mxu0 %v1750
    %1796 = vmatpush1.bf16.msra.mxu0 %v1749
    %1797 = vmatprep.subr.bf16.mxu0 0
    %1798 = vmatpush2.bf16.msra.mxu0 0
    %1799 = vmatprep.subr.bf16.mxu0 0
    %1800 = vmatpush2.bf16.msra.mxu0 0
    %1801 = vmatprep.subr.bf16.mxu0 0
    %1802 = vmatpush2.bf16.msra.mxu0 0
    %1803 = vmatprep.subr.bf16.mxu0 0
    %1804 = vmatpush2.bf16.msra.mxu0 0
    %1805 = vmatprep.subr.bf16.mxu0 0
    %1806 = vmatpush2.bf16.msra.mxu0 0
    %1807 = vmatprep.subr.bf16.mxu0 0
    %1808 = vmatpush2.bf16.msra.mxu0 0
    %1809 = vmatprep.subr.bf16.mxu0 0
    %1810 = vmatpush2.bf16.msra.mxu0 0
    %1811 = vmatprep.subr.bf16.mxu0 0
    %1812 = vmatpush2.bf16.msra.mxu0 0
    %1813 = vmatprep.mubr.bf16.mxu0 0
    %1814 = vmatmul.mubr.bf16.gmra.mxu0 %v1178
    %v1815 = vpop.f32.mrf.mxu0
    %v1816 = vadd.f32 0.0, %v1815
    %v1817 = vpop.f32.mrf.mxu0
    %v1818 = vadd.f32 0.0, %v1817
    %v1819 = vpop.f32.mrf.mxu0
    %v1820 = vadd.f32 0.0, %v1819
    %v1821 = vpop.f32.mrf.mxu0
    %v1822 = vadd.f32 0.0, %v1821
    %1823 = vmatprep.mubr.bf16.mxu0 0
    %1824 = vmatmul.mubr.bf16.gmra.mxu0 %v1179
    %v1825 = vpop.f32.mrf.mxu0
    %v1826 = vadd.f32 0.0, %v1825
    %v1827 = vpop.f32.mrf.mxu0
    %v1828 = vadd.f32 0.0, %v1827
    %v1829 = vpop.f32.mrf.mxu0
    %v1830 = vadd.f32 0.0, %v1829
    %v1831 = vpop.f32.mrf.mxu0
    %v1832 = vadd.f32 0.0, %v1831
    %1833 = vmatprep.mubr.bf16.mxu0 0
    %1834 = vmatmul.mubr.bf16.gmra.mxu0 %v1180
    %v1835 = vpop.f32.mrf.mxu0
    %v1836 = vadd.f32 0.0, %v1835
    %v1837 = vpop.f32.mrf.mxu0
    %v1838 = vadd.f32 0.0, %v1837
    %v1839 = vpop.f32.mrf.mxu0
    %v1840 = vpop.f32.mrf.mxu0
    %1841 = vdwg.mxu0
    %v1842 = vadd.f32 %v1675, %v1816
    %v1843 = vadd.f32 %v1676, %v1818
    %v1844 = vadd.f32 %v1677, %v1820
    %v1845 = vadd.f32 %v1678, %v1822
    %v1846 = vadd.f32 %v1679, %v1826
    %v1847 = vadd.f32 %v1680, %v1828
    %v1848 = vadd.f32 %v1681, %v1830
    %v1849 = vadd.f32 %v1682, %v1832
    %v1850 = vadd.f32 %v1683, %v1836
    %v1851 = vadd.f32 %v1684, %v1838
    %v1852 = vld [vmem:[%s2 + $0x200] sm:$0xff]
    %v1853 = vld [vmem:[%s2 + $0x208] sm:$0xff]
    %v1854 = vld [vmem:[%s2 + $0x210] sm:$0xff]
    %v1855 = vld [vmem:[%s2 + $0x218] sm:$0xff]
    %v1856 = vld [vmem:[%s2 + $0x220] sm:$0xff]
    %v1857 = vld [vmem:[%s2 + $0x228] sm:$0xff]
    %v1858 = vld [vmem:[%s2 + $0x230] sm:$0xff]
    %v1859 = vld [vmem:[%s2 + $0x238] sm:$0xff]
    %v1860 = vld [vmem:[%s2 + $0x240] sm:$0xff]
    %v1861 = vld [vmem:[%s2 + $0x248] sm:$0xff]
    %v1862 = vld [vmem:[%s2 + $0x250] sm:$0xff]
    %v1863 = vld [vmem:[%s2 + $0x258] sm:$0xff]
    %v1864 = vld [vmem:[%s2 + $0x260] sm:$0xff]
    %v1865 = vld [vmem:[%s2 + $0x268] sm:$0xff]
    %v1866 = vld [vmem:[%s2 + $0x270] sm:$0xff]
    %v1867 = vld [vmem:[%s2 + $0x278] sm:$0xff]
    %v1884 = vunpack.c.l.b16 %v1852
    %v1885 = vunpack.c.h.b16 %v1852
    %v1886 = vunpack.c.l.b16 %v1853
    %v1887 = vunpack.c.h.b16 %v1853
    %v1888 = vunpack.c.l.b16 %v1854
    %v1889 = vunpack.c.h.b16 %v1854
    %v1890 = vunpack.c.l.b16 %v1855
    %v1891 = vunpack.c.h.b16 %v1855
    %v1892 = vunpack.c.l.b16 %v1856
    %v1893 = vunpack.c.h.b16 %v1856
    %v1894 = vunpack.c.l.b16 %v1857
    %v1895 = vunpack.c.h.b16 %v1857
    %v1896 = vunpack.c.l.b16 %v1858
    %v1897 = vunpack.c.h.b16 %v1858
    %v1898 = vunpack.c.l.b16 %v1859
    %v1899 = vunpack.c.h.b16 %v1859
    %v1900 = vunpack.c.l.b16 %v1860
    %v1901 = vunpack.c.h.b16 %v1860
    %v1902 = vunpack.c.l.b16 %v1861
    %v1903 = vunpack.c.h.b16 %v1861
    %v1904 = vunpack.c.l.b16 %v1862
    %v1905 = vunpack.c.h.b16 %v1862
    %v1906 = vunpack.c.l.b16 %v1863
    %v1907 = vunpack.c.h.b16 %v1863
    %v1908 = vunpack.c.l.b16 %v1864
    %v1909 = vunpack.c.h.b16 %v1864
    %v1910 = vunpack.c.l.b16 %v1865
    %v1911 = vunpack.c.h.b16 %v1865
    %v1912 = vunpack.c.l.b16 %v1866
    %v1913 = vunpack.c.h.b16 %v1866
    %v1914 = vunpack.c.l.b16 %v1867
    %v1915 = vunpack.c.h.b16 %v1867
    %v1916 = vpack.c.b16 %v1886, %v1884
    %v1917 = vpack.c.b16 %v1887, %v1885
    %v1918 = vpack.c.b16 %v1890, %v1888
    %v1919 = vpack.c.b16 %v1891, %v1889
    %v1920 = vpack.c.b16 %v1894, %v1892
    %v1921 = vpack.c.b16 %v1895, %v1893
    %v1922 = vpack.c.b16 %v1898, %v1896
    %v1923 = vpack.c.b16 %v1899, %v1897
    %v1924 = vpack.c.b16 %v1902, %v1900
    %v1925 = vpack.c.b16 %v1903, %v1901
    %v1926 = vpack.c.b16 %v1906, %v1904
    %v1927 = vpack.c.b16 %v1907, %v1905
    %v1928 = vpack.c.b16 %v1910, %v1908
    %v1929 = vpack.c.b16 %v1911, %v1909
    %v1930 = vpack.c.b16 %v1914, %v1912
    %v1931 = vpack.c.b16 %v1915, %v1913
    %1948 = vmatprep.subr.bf16.mxu0 %v1931
    %1949 = vmatpush1.bf16.msra.mxu0 %v1930
    %1950 = vmatprep.subr.bf16.mxu0 %v1929
    %1951 = vmatpush1.bf16.msra.mxu0 %v1928
    %1952 = vmatprep.subr.bf16.mxu0 %v1927
    %1953 = vmatpush1.bf16.msra.mxu0 %v1926
    %1954 = vmatprep.subr.bf16.mxu0 %v1925
    %1955 = vmatpush1.bf16.msra.mxu0 %v1924
    %1956 = vmatprep.subr.bf16.mxu0 %v1923
    %1957 = vmatpush1.bf16.msra.mxu0 %v1922
    %1958 = vmatprep.subr.bf16.mxu0 %v1921
    %1959 = vmatpush1.bf16.msra.mxu0 %v1920
    %1960 = vmatprep.subr.bf16.mxu0 %v1919
    %1961 = vmatpush1.bf16.msra.mxu0 %v1918
    %1962 = vmatprep.subr.bf16.mxu0 %v1917
    %1963 = vmatpush1.bf16.msra.mxu0 %v1916
    %1964 = vmatprep.subr.bf16.mxu0 0
    %1965 = vmatpush2.bf16.msra.mxu0 0
    %1966 = vmatprep.subr.bf16.mxu0 0
    %1967 = vmatpush2.bf16.msra.mxu0 0
    %1968 = vmatprep.subr.bf16.mxu0 0
    %1969 = vmatpush2.bf16.msra.mxu0 0
    %1970 = vmatprep.subr.bf16.mxu0 0
    %1971 = vmatpush2.bf16.msra.mxu0 0
    %1972 = vmatprep.subr.bf16.mxu0 0
    %1973 = vmatpush2.bf16.msra.mxu0 0
    %1974 = vmatprep.subr.bf16.mxu0 0
    %1975 = vmatpush2.bf16.msra.mxu0 0
    %1976 = vmatprep.subr.bf16.mxu0 0
    %1977 = vmatpush2.bf16.msra.mxu0 0
    %1978 = vmatprep.subr.bf16.mxu0 0
    %1979 = vmatpush2.bf16.msra.mxu0 0
    %1980 = vmatprep.mubr.bf16.mxu0 0
    %1981 = vmatmul.mubr.bf16.gmra.mxu0 %v1175
    %v1982 = vpop.f32.mrf.mxu0
    %v1983 = vadd.f32 0.0, %v1982
    %v1984 = vpop.f32.mrf.mxu0
    %v1985 = vadd.f32 0.0, %v1984
    %v1986 = vpop.f32.mrf.mxu0
    %v1987 = vadd.f32 0.0, %v1986
    %v1988 = vpop.f32.mrf.mxu0
    %v1989 = vadd.f32 0.0, %v1988
    %1990 = vmatprep.mubr.bf16.mxu0 0
    %1991 = vmatmul.mubr.bf16.gmra.mxu0 %v1176
    %v1992 = vpop.f32.mrf.mxu0
    %v1993 = vadd.f32 0.0, %v1992
    %v1994 = vpop.f32.mrf.mxu0
    %v1995 = vadd.f32 0.0, %v1994
    %v1996 = vpop.f32.mrf.mxu0
    %v1997 = vadd.f32 0.0, %v1996
    %v1998 = vpop.f32.mrf.mxu0
    %v1999 = vadd.f32 0.0, %v1998
    %2000 = vmatprep.mubr.bf16.mxu0 0
    %2001 = vmatmul.mubr.bf16.gmra.mxu0 %v1177
    %v2002 = vpop.f32.mrf.mxu0
    %v2003 = vadd.f32 0.0, %v2002
    %v2004 = vpop.f32.mrf.mxu0
    %v2005 = vadd.f32 0.0, %v2004
    %v2006 = vpop.f32.mrf.mxu0
    %v2007 = vpop.f32.mrf.mxu0
    %2008 = vdwg.mxu0
    %v2009 = vadd.f32 %v1842, %v1983
    %v2010 = vadd.f32 %v1843, %v1985
    %v2011 = vadd.f32 %v1844, %v1987
    %v2012 = vadd.f32 %v1845, %v1989
    %v2013 = vadd.f32 %v1846, %v1993
    %v2014 = vadd.f32 %v1847, %v1995
    %v2015 = vadd.f32 %v1848, %v1997
    %v2016 = vadd.f32 %v1849, %v1999
    %v2017 = vadd.f32 %v1850, %v2003
    %v2018 = vadd.f32 %v1851, %v2005
    %2019 = vmatprep.subr.bf16.mxu0 %v1288
    %2020 = vmatpush1.bf16.msra.mxu0 %v1287
    %2021 = vmatprep.subr.bf16.mxu0 %v1286
    %2022 = vmatpush1.bf16.msra.mxu0 %v1285
    %2023 = vmatprep.subr.bf16.mxu0 %v1284
    %2024 = vmatpush1.bf16.msra.mxu0 %v1283
    %2025 = vmatprep.subr.bf16.mxu0 %v1282
    %2026 = vmatpush1.bf16.msra.mxu0 %v1281
    %2027 = vmatprep.subr.bf16.mxu0 %v1280
    %2028 = vmatpush1.bf16.msra.mxu0 %v1279
    %2029 = vmatprep.subr.bf16.mxu0 %v1278
    %2030 = vmatpush1.bf16.msra.mxu0 %v1277
    %2031 = vmatprep.subr.bf16.mxu0 %v1276
    %2032 = vmatpush1.bf16.msra.mxu0 %v1275
    %2033 = vmatprep.subr.bf16.mxu0 %v1274
    %2034 = vmatpush1.bf16.msra.mxu0 %v1273
    %2035 = vmatprep.subr.bf16.mxu0 0
    %2036 = vmatpush2.bf16.msra.mxu0 0
    %2037 = vmatprep.subr.bf16.mxu0 0
    %2038 = vmatpush2.bf16.msra.mxu0 0
    %2039 = vmatprep.subr.bf16.mxu0 0
    %2040 = vmatpush2.bf16.msra.mxu0 0
    %2041 = vmatprep.subr.bf16.mxu0 0
    %2042 = vmatpush2.bf16.msra.mxu0 0
    %2043 = vmatprep.subr.bf16.mxu0 0
    %2044 = vmatpush2.bf16.msra.mxu0 0
    %2045 = vmatprep.subr.bf16.mxu0 0
    %2046 = vmatpush2.bf16.msra.mxu0 0
    %2047 = vmatprep.subr.bf16.mxu0 0
    %2048 = vmatpush2.bf16.msra.mxu0 0
    %2049 = vmatprep.subr.bf16.mxu0 0
    %2050 = vmatpush2.bf16.msra.mxu0 0
    %2051 = vmatprep.mubr.bf16.mxu0 0
    %2052 = vmatmul.mubr.bf16.gmra.mxu0 %v1528
    %v2053 = vpop.f32.mrf.mxu0
    %v2054 = vadd.f32 0.0, %v2053
    %v2055 = vpop.f32.mrf.mxu0
    %v2056 = vadd.f32 0.0, %v2055
    %v2057 = vpop.f32.mrf.mxu0
    %v2058 = vadd.f32 0.0, %v2057
    %v2059 = vpop.f32.mrf.mxu0
    %v2060 = vadd.f32 0.0, %v2059
    %2061 = vmatprep.mubr.bf16.mxu0 0
    %2062 = vmatmul.mubr.bf16.gmra.mxu0 %v1530
    %v2063 = vpop.f32.mrf.mxu0
    %v2064 = vadd.f32 0.0, %v2063
    %v2065 = vpop.f32.mrf.mxu0
    %v2066 = vadd.f32 0.0, %v2065
    %v2067 = vpop.f32.mrf.mxu0
    %v2068 = vadd.f32 0.0, %v2067
    %v2069 = vpop.f32.mrf.mxu0
    %v2070 = vadd.f32 0.0, %v2069
    %2071 = vmatprep.mubr.bf16.mxu0 0
    %2072 = vmatmul.mubr.bf16.gmra.mxu0 %v1529
    %v2073 = vpop.f32.mrf.mxu0
    %v2074 = vadd.f32 0.0, %v2073
    %v2075 = vpop.f32.mrf.mxu0
    %v2076 = vadd.f32 0.0, %v2075
    %v2077 = vpop.f32.mrf.mxu0
    %v2078 = vpop.f32.mrf.mxu0
    %2079 = vdwg.mxu0
    %2080 = vmatprep.subr.bf16.mxu0 %v1429
    %2081 = vmatpush1.bf16.msra.mxu0 %v1428
    %2082 = vmatprep.subr.bf16.mxu0 %v1427
    %2083 = vmatpush1.bf16.msra.mxu0 %v1426
    %2084 = vmatprep.subr.bf16.mxu0 %v1425
    %2085 = vmatpush1.bf16.msra.mxu0 %v1424
    %2086 = vmatprep.subr.bf16.mxu0 %v1423
    %2087 = vmatpush1.bf16.msra.mxu0 %v1422
    %2088 = vmatprep.subr.bf16.mxu0 %v1421
    %2089 = vmatpush1.bf16.msra.mxu0 %v1420
    %2090 = vmatprep.subr.bf16.mxu0 %v1419
    %2091 = vmatpush1.bf16.msra.mxu0 %v1418
    %2092 = vmatprep.subr.bf16.mxu0 %v1417
    %2093 = vmatpush1.bf16.msra.mxu0 %v1416
    %2094 = vmatprep.subr.bf16.mxu0 %v1415
    %2095 = vmatpush1.bf16.msra.mxu0 %v1414
    %2096 = vmatprep.subr.bf16.mxu0 0
    %2097 = vmatpush2.bf16.msra.mxu0 0
    %2098 = vmatprep.subr.bf16.mxu0 0
    %2099 = vmatpush2.bf16.msra.mxu0 0
    %2100 = vmatprep.subr.bf16.mxu0 0
    %2101 = vmatpush2.bf16.msra.mxu0 0
    %2102 = vmatprep.subr.bf16.mxu0 0
    %2103 = vmatpush2.bf16.msra.mxu0 0
    %2104 = vmatprep.subr.bf16.mxu0 0
    %2105 = vmatpush2.bf16.msra.mxu0 0
    %2106 = vmatprep.subr.bf16.mxu0 0
    %2107 = vmatpush2.bf16.msra.mxu0 0
    %2108 = vmatprep.subr.bf16.mxu0 0
    %2109 = vmatpush2.bf16.msra.mxu0 0
    %2110 = vmatprep.subr.bf16.mxu0 0
    %2111 = vmatpush2.bf16.msra.mxu0 0
    %2112 = vmatprep.mubr.bf16.mxu0 0
    %2113 = vmatmul.mubr.bf16.gmra.mxu0 %v1219
    %v2114 = vpop.f32.mrf.mxu0
    %v2115 = vadd.f32 %v2054, %v2114
    %v2116 = vpop.f32.mrf.mxu0
    %v2117 = vadd.f32 %v2056, %v2116
    %v2118 = vpop.f32.mrf.mxu0
    %v2119 = vadd.f32 %v2058, %v2118
    %v2120 = vpop.f32.mrf.mxu0
    %v2121 = vadd.f32 %v2060, %v2120
    %2122 = vmatprep.mubr.bf16.mxu0 0
    %2123 = vmatmul.mubr.bf16.gmra.mxu0 %v1221
    %v2124 = vpop.f32.mrf.mxu0
    %v2125 = vadd.f32 %v2064, %v2124
    %v2126 = vpop.f32.mrf.mxu0
    %v2127 = vadd.f32 %v2066, %v2126
    %v2128 = vpop.f32.mrf.mxu0
    %v2129 = vadd.f32 %v2068, %v2128
    %v2130 = vpop.f32.mrf.mxu0
    %v2131 = vadd.f32 %v2070, %v2130
    %2132 = vmatprep.mubr.bf16.mxu0 0
    %2133 = vmatmul.mubr.bf16.gmra.mxu0 %v1220
    %v2134 = vpop.f32.mrf.mxu0
    %v2135 = vadd.f32 %v2074, %v2134
    %v2136 = vpop.f32.mrf.mxu0
    %v2137 = vadd.f32 %v2076, %v2136
    %v2138 = vpop.f32.mrf.mxu0
    %v2139 = vpop.f32.mrf.mxu0
    %2140 = vdwg.mxu0
    %2141 = vmatprep.subr.bf16.mxu0 %v1597
    %2142 = vmatpush1.bf16.msra.mxu0 %v1596
    %2143 = vmatprep.subr.bf16.mxu0 %v1595
    %2144 = vmatpush1.bf16.msra.mxu0 %v1594
    %2145 = vmatprep.subr.bf16.mxu0 %v1593
    %2146 = vmatpush1.bf16.msra.mxu0 %v1592
    %2147 = vmatprep.subr.bf16.mxu0 %v1591
    %2148 = vmatpush1.bf16.msra.mxu0 %v1590
    %2149 = vmatprep.subr.bf16.mxu0 %v1589
    %2150 = vmatpush1.bf16.msra.mxu0 %v1588
    %2151 = vmatprep.subr.bf16.mxu0 %v1587
    %2152 = vmatpush1.bf16.msra.mxu0 %v1586
    %2153 = vmatprep.subr.bf16.mxu0 %v1585
    %2154 = vmatpush1.bf16.msra.mxu0 %v1584
    %2155 = vmatprep.subr.bf16.mxu0 %v1583
    %2156 = vmatpush1.bf16.msra.mxu0 %v1582
    %2157 = vmatprep.subr.bf16.mxu0 0
    %2158 = vmatpush2.bf16.msra.mxu0 0
    %2159 = vmatprep.subr.bf16.mxu0 0
    %2160 = vmatpush2.bf16.msra.mxu0 0
    %2161 = vmatprep.subr.bf16.mxu0 0
    %2162 = vmatpush2.bf16.msra.mxu0 0
    %2163 = vmatprep.subr.bf16.mxu0 0
    %2164 = vmatpush2.bf16.msra.mxu0 0
    %2165 = vmatprep.subr.bf16.mxu0 0
    %2166 = vmatpush2.bf16.msra.mxu0 0
    %2167 = vmatprep.subr.bf16.mxu0 0
    %2168 = vmatpush2.bf16.msra.mxu0 0
    %2169 = vmatprep.subr.bf16.mxu0 0
    %2170 = vmatpush2.bf16.msra.mxu0 0
    %2171 = vmatprep.subr.bf16.mxu0 0
    %2172 = vmatpush2.bf16.msra.mxu0 0
    %2173 = vmatprep.mubr.bf16.mxu0 0
    %2174 = vmatmul.mubr.bf16.gmra.mxu0 %v1178
    %v2175 = vpop.f32.mrf.mxu0
    %v2176 = vadd.f32 0.0, %v2175
    %v2177 = vpop.f32.mrf.mxu0
    %v2178 = vadd.f32 0.0, %v2177
    %v2179 = vpop.f32.mrf.mxu0
    %v2180 = vadd.f32 0.0, %v2179
    %v2181 = vpop.f32.mrf.mxu0
    %v2182 = vadd.f32 0.0, %v2181
    %2183 = vmatprep.mubr.bf16.mxu0 0
    %2184 = vmatmul.mubr.bf16.gmra.mxu0 %v1179
    %v2185 = vpop.f32.mrf.mxu0
    %v2186 = vadd.f32 0.0, %v2185
    %v2187 = vpop.f32.mrf.mxu0
    %v2188 = vadd.f32 0.0, %v2187
    %v2189 = vpop.f32.mrf.mxu0
    %v2190 = vadd.f32 0.0, %v2189
    %v2191 = vpop.f32.mrf.mxu0
    %v2192 = vadd.f32 0.0, %v2191
    %2193 = vmatprep.mubr.bf16.mxu0 0
    %2194 = vmatmul.mubr.bf16.gmra.mxu0 %v1180
    %v2195 = vpop.f32.mrf.mxu0
    %v2196 = vadd.f32 0.0, %v2195
    %v2197 = vpop.f32.mrf.mxu0
    %v2198 = vadd.f32 0.0, %v2197
    %v2199 = vpop.f32.mrf.mxu0
    %v2200 = vpop.f32.mrf.mxu0
    %2201 = vdwg.mxu0
    %v2202 = vadd.f32 %v2115, %v2176
    %v2203 = vadd.f32 %v2117, %v2178
    %v2204 = vadd.f32 %v2119, %v2180
    %v2205 = vadd.f32 %v2121, %v2182
    %v2206 = vadd.f32 %v2125, %v2186
    %v2207 = vadd.f32 %v2127, %v2188
    %v2208 = vadd.f32 %v2129, %v2190
    %v2209 = vadd.f32 %v2131, %v2192
    %v2210 = vadd.f32 %v2135, %v2196
    %v2211 = vadd.f32 %v2137, %v2198
    %2212 = vmatprep.subr.bf16.mxu0 %v1764
    %2213 = vmatpush1.bf16.msra.mxu0 %v1763
    %2214 = vmatprep.subr.bf16.mxu0 %v1762
    %2215 = vmatpush1.bf16.msra.mxu0 %v1761
    %2216 = vmatprep.subr.bf16.mxu0 %v1760
    %2217 = vmatpush1.bf16.msra.mxu0 %v1759
    %2218 = vmatprep.subr.bf16.mxu0 %v1758
    %2219 = vmatpush1.bf16.msra.mxu0 %v1757
    %2220 = vmatprep.subr.bf16.mxu0 %v1756
    %2221 = vmatpush1.bf16.msra.mxu0 %v1755
    %2222 = vmatprep.subr.bf16.mxu0 %v1754
    %2223 = vmatpush1.bf16.msra.mxu0 %v1753
    %2224 = vmatprep.subr.bf16.mxu0 %v1752
    %2225 = vmatpush1.bf16.msra.mxu0 %v1751
    %2226 = vmatprep.subr.bf16.mxu0 %v1750
    %2227 = vmatpush1.bf16.msra.mxu0 %v1749
    %2228 = vmatprep.subr.bf16.mxu0 0
    %2229 = vmatpush2.bf16.msra.mxu0 0
    %2230 = vmatprep.subr.bf16.mxu0 0
    %2231 = vmatpush2.bf16.msra.mxu0 0
    %2232 = vmatprep.subr.bf16.mxu0 0
    %2233 = vmatpush2.bf16.msra.mxu0 0
    %2234 = vmatprep.subr.bf16.mxu0 0
    %2235 = vmatpush2.bf16.msra.mxu0 0
    %2236 = vmatprep.subr.bf16.mxu0 0
    %2237 = vmatpush2.bf16.msra.mxu0 0
    %2238 = vmatprep.subr.bf16.mxu0 0
    %2239 = vmatpush2.bf16.msra.mxu0 0
    %2240 = vmatprep.subr.bf16.mxu0 0
    %2241 = vmatpush2.bf16.msra.mxu0 0
    %2242 = vmatprep.subr.bf16.mxu0 0
    %2243 = vmatpush2.bf16.msra.mxu0 0
    %2244 = vmatprep.mubr.bf16.mxu0 0
    %2245 = vmatmul.mubr.bf16.gmra.mxu0 %v1175
    %v2246 = vpop.f32.mrf.mxu0
    %v2247 = vadd.f32 0.0, %v2246
    %v2248 = vpop.f32.mrf.mxu0
    %v2249 = vadd.f32 0.0, %v2248
    %v2250 = vpop.f32.mrf.mxu0
    %v2251 = vadd.f32 0.0, %v2250
    %v2252 = vpop.f32.mrf.mxu0
    %v2253 = vadd.f32 0.0, %v2252
    %2254 = vmatprep.mubr.bf16.mxu0 0
    %2255 = vmatmul.mubr.bf16.gmra.mxu0 %v1176
    %v2256 = vpop.f32.mrf.mxu0
    %v2257 = vadd.f32 0.0, %v2256
    %v2258 = vpop.f32.mrf.mxu0
    %v2259 = vadd.f32 0.0, %v2258
    %v2260 = vpop.f32.mrf.mxu0
    %v2261 = vadd.f32 0.0, %v2260
    %v2262 = vpop.f32.mrf.mxu0
    %v2263 = vadd.f32 0.0, %v2262
    %2264 = vmatprep.mubr.bf16.mxu0 0
    %2265 = vmatmul.mubr.bf16.gmra.mxu0 %v1177
    %v2266 = vpop.f32.mrf.mxu0
    %v2267 = vadd.f32 0.0, %v2266
    %v2268 = vpop.f32.mrf.mxu0
    %v2269 = vadd.f32 0.0, %v2268
    %v2270 = vpop.f32.mrf.mxu0
    %v2271 = vpop.f32.mrf.mxu0
    %2272 = vdwg.mxu0
    %v2273 = vadd.f32 %v2202, %v2247
    %v2274 = vadd.f32 %v2203, %v2249
    %v2275 = vadd.f32 %v2204, %v2251
    %v2276 = vadd.f32 %v2205, %v2253
    %v2277 = vadd.f32 %v2206, %v2257
    %v2278 = vadd.f32 %v2207, %v2259
    %v2279 = vadd.f32 %v2208, %v2261
    %v2280 = vadd.f32 %v2209, %v2263
    %v2281 = vadd.f32 %v2210, %v2267
    %v2282 = vadd.f32 %v2211, %v2269
    %v2284 = vrot.slane %v1180, 4
    %v2285 = vsel %vm1216, %v1220, %v2284
    %2288 = vmatprep.subr.bf16.mxu0 %v1931
    %2289 = vmatpush1.bf16.msra.mxu0 %v1930
    %2290 = vmatprep.subr.bf16.mxu0 %v1929
    %2291 = vmatpush1.bf16.msra.mxu0 %v1928
    %2292 = vmatprep.subr.bf16.mxu0 %v1927
    %2293 = vmatpush1.bf16.msra.mxu0 %v1926
    %2294 = vmatprep.subr.bf16.mxu0 %v1925
    %2295 = vmatpush1.bf16.msra.mxu0 %v1924
    %2296 = vmatprep.subr.bf16.mxu0 %v1923
    %2297 = vmatpush1.bf16.msra.mxu0 %v1922
    %2298 = vmatprep.subr.bf16.mxu0 %v1921
    %2299 = vmatpush1.bf16.msra.mxu0 %v1920
    %2300 = vmatprep.subr.bf16.mxu0 %v1919
    %2301 = vmatpush1.bf16.msra.mxu0 %v1918
    %2302 = vmatprep.subr.bf16.mxu0 %v1917
    %2303 = vmatpush1.bf16.msra.mxu0 %v1916
    %2304 = vmatprep.subr.bf16.mxu0 0
    %2305 = vmatpush2.bf16.msra.mxu0 0
    %2306 = vmatprep.subr.bf16.mxu0 0
    %2307 = vmatpush2.bf16.msra.mxu0 0
    %2308 = vmatprep.subr.bf16.mxu0 0
    %2309 = vmatpush2.bf16.msra.mxu0 0
    %2310 = vmatprep.subr.bf16.mxu0 0
    %2311 = vmatpush2.bf16.msra.mxu0 0
    %2312 = vmatprep.subr.bf16.mxu0 0
    %2313 = vmatpush2.bf16.msra.mxu0 0
    %2314 = vmatprep.subr.bf16.mxu0 0
    %2315 = vmatpush2.bf16.msra.mxu0 0
    %2316 = vmatprep.subr.bf16.mxu0 0
    %2317 = vmatpush2.bf16.msra.mxu0 0
    %2318 = vmatprep.subr.bf16.mxu0 0
    %2319 = vmatpush2.bf16.msra.mxu0 0
    %2320 = vmatprep.mubr.bf16.mxu0 0
    %2321 = vmatmul.mubr.bf16.gmra.mxu0 %v1221
    %v2322 = vpop.f32.mrf.mxu0
    %v2323 = vadd.f32 0.0, %v2322
    %v2324 = vpop.f32.mrf.mxu0
    %v2325 = vadd.f32 0.0, %v2324
    %v2326 = vpop.f32.mrf.mxu0
    %v2327 = vadd.f32 0.0, %v2326
    %v2328 = vpop.f32.mrf.mxu0
    %v2329 = vadd.f32 0.0, %v2328
    %2330 = vmatprep.mubr.bf16.mxu0 0
    %2331 = vmatmul.mubr.bf16.gmra.mxu0 %v2285
    %v2332 = vpop.f32.mrf.mxu0
    %v2333 = vadd.f32 0.0, %v2332
    %v2334 = vpop.f32.mrf.mxu0
    %v2335 = vadd.f32 0.0, %v2334
    %v2336 = vpop.f32.mrf.mxu0
    %v2337 = vadd.f32 0.0, %v2336
    %v2338 = vpop.f32.mrf.mxu0
    %v2339 = vadd.f32 0.0, %v2338
    %2340 = vmatprep.mubr.bf16.mxu0 0
    %2341 = vmatmul.mubr.bf16.gmra.mxu0 %v2284
    %v2342 = vpop.f32.mrf.mxu0
    %v2343 = vadd.f32 0.0, %v2342
    %v2344 = vpop.f32.mrf.mxu0
    %v2345 = vadd.f32 0.0, %v2344
    %v2346 = vpop.f32.mrf.mxu0
    %v2347 = vpop.f32.mrf.mxu0
    %2348 = vdwg.mxu0
    %v2349 = vadd.f32 %v2273, %v2323
    %v2350 = vadd.f32 %v2274, %v2325
    %v2351 = vadd.f32 %v2275, %v2327
    %v2352 = vadd.f32 %v2276, %v2329
    %v2353 = vadd.f32 %v2277, %v2333
    %v2354 = vadd.f32 %v2278, %v2335
    %v2355 = vadd.f32 %v2279, %v2337
    %v2356 = vadd.f32 %v2280, %v2339
    %v2357 = vadd.f32 %v2281, %v2343
    %v2358 = vadd.f32 %v2282, %v2345
    %v2359 = vmax.f32 %v2009, %v2349
    %v2360 = vmax.f32 %v2010, %v2350
    %v2361 = vmax.f32 %v2011, %v2351
    %v2362 = vmax.f32 %v2012, %v2352
    %v2363 = vmax.f32 %v2013, %v2353
    %v2364 = vmax.f32 %v2014, %v2354
    %v2365 = vmax.f32 %v2015, %v2355
    %v2366 = vmax.f32 %v2016, %v2356
    %v2367 = vmax.f32 %v2017, %v2357
    %v2368 = vmax.f32 %v2018, %v2358
    %v2369 = vmax.f32 %v2359, %v2360
    %v2370 = vmax.f32 %v2361, %v2362
    %v2371 = vmax.f32 %v2363, %v2364
    %v2372 = vmax.f32 %v2365, %v2366
    %v2373 = vmax.f32 %v2367, %v2368
    %v2374 = vld [vmem:[%s6 + $0x1] sm:$0x1]
    %v2375 = vlaneseq
    %v2376 = vshrl.u32 %v2375, 7
    %v2377 = vsub.s32 0, %v2376
    %v2378 = vrot.slane %v2374, %v2377
    %v2379 = vadd.f32 %v2369, %v2378
    %v2380 = vadd.f32 %v2370, %v2378
    %v2381 = vadd.f32 %v2371, %v2378
    %v2382 = vadd.f32 %v2372, %v2378
    %v2383 = vadd.f32 %v2373, %v2378
    %v2384 = vmax.f32 %v2379, 0.0
    %v2385 = vmax.f32 %v2380, 0.0
    %v2386 = vmax.f32 %v2381, 0.0
    %v2387 = vmax.f32 %v2382, 0.0
    %v2388 = vmax.f32 %v2383, 0.0
    %v2389 = vpack.c.bf16 %v2385, %v2384
    %v2390 = vpack.c.bf16 %v2387, %v2386
    %v2391 = vpack.c.bf16 %v2388, %v2388
    %v2392 = vld [vmem:[%s3] sm:$0xf]
    %v2393 = vld [vmem:[%s3 + $0x4] sm:$0xf]
    %v2394 = vld [vmem:[%s3 + $0x8] sm:$0xf]
    %v2395 = vld [vmem:[%s3 + $0xc] sm:$0xf]
    %v2396 = vld [vmem:[%s3 + $0x10] sm:$0xf]
    %v2397 = vld [vmem:[%s3 + $0x14] sm:$0xf]
    %v2398 = vld [vmem:[%s3 + $0x18] sm:$0xf]
    %v2399 = vld [vmem:[%s3 + $0x1c] sm:$0xf]
    %v2400 = vld [vmem:[%s3 + $0x20] sm:$0xf]
    %v2401 = vld [vmem:[%s3 + $0x24] sm:$0xf]
    %v2402 = vld [vmem:[%s3 + $0x28] sm:$0xf]
    %v2403 = vld [vmem:[%s3 + $0x2c] sm:$0xf]
    %v2404 = vld [vmem:[%s3 + $0x30] sm:$0xf]
    %v2405 = vld [vmem:[%s3 + $0x34] sm:$0xf]
    %v2406 = vld [vmem:[%s3 + $0x38] sm:$0xf]
    %v2407 = vld [vmem:[%s3 + $0x3c] sm:$0xf]
    %v2408 = vld [vmem:[%s3 + $0x40] sm:$0xf]
    %v2409 = vld [vmem:[%s3 + $0x44] sm:$0xf]
    %v2410 = vld [vmem:[%s3 + $0x48] sm:$0xf]
    %v2411 = vld [vmem:[%s3 + $0x4c] sm:$0xf]
    %v2412 = vld [vmem:[%s3 + $0x50] sm:$0xf]
    %v2413 = vld [vmem:[%s3 + $0x54] sm:$0xf]
    %v2414 = vld [vmem:[%s3 + $0x58] sm:$0xf]
    %v2415 = vld [vmem:[%s3 + $0x5c] sm:$0xf]
    %v2416 = vld [vmem:[%s3 + $0x60] sm:$0xf]
    %v2417 = vld [vmem:[%s3 + $0x64] sm:$0xf]
    %v2418 = vld [vmem:[%s3 + $0x68] sm:$0xf]
    %v2419 = vld [vmem:[%s3 + $0x6c] sm:$0xf]
    %v2420 = vld [vmem:[%s3 + $0x70] sm:$0xf]
    %v2421 = vld [vmem:[%s3 + $0x74] sm:$0xf]
    %v2422 = vld [vmem:[%s3 + $0x78] sm:$0xf]
    %v2423 = vld [vmem:[%s3 + $0x7c] sm:$0xf]
    %v2425 = vrot.slane %v2389, 4
    %v2443 = vunpack.c.l.b16 %v2408
    %v2444 = vunpack.c.l.b16 %v2409
    %v2445 = vunpack.c.l.b16 %v2410
    %v2446 = vunpack.c.l.b16 %v2411
    %v2447 = vunpack.c.l.b16 %v2412
    %v2448 = vunpack.c.l.b16 %v2413
    %v2449 = vunpack.c.l.b16 %v2414
    %v2450 = vunpack.c.l.b16 %v2415
    %v2451 = vunpack.c.l.b16 %v2416
    %v2452 = vunpack.c.l.b16 %v2417
    %v2453 = vunpack.c.l.b16 %v2418
    %v2454 = vunpack.c.l.b16 %v2419
    %v2455 = vunpack.c.l.b16 %v2420
    %v2456 = vunpack.c.l.b16 %v2421
    %v2457 = vunpack.c.l.b16 %v2422
    %v2458 = vunpack.c.l.b16 %v2423
    %v2459 = vpack.c.b16 %v2444, %v2443
    %v2460 = vpack.c.b16 %v2446, %v2445
    %v2461 = vpack.c.b16 %v2448, %v2447
    %v2462 = vpack.c.b16 %v2450, %v2449
    %v2463 = vpack.c.b16 %v2452, %v2451
    %v2464 = vpack.c.b16 %v2454, %v2453
    %v2465 = vpack.c.b16 %v2456, %v2455
    %v2466 = vpack.c.b16 %v2458, %v2457
    %2475 = vmatprep.subr.bf16.mxu0 0
    %2476 = vmatpush1.bf16.msra.mxu0 %v2466
    %2477 = vmatprep.subr.bf16.mxu0 0
    %2478 = vmatpush1.bf16.msra.mxu0 %v2465
    %2479 = vmatprep.subr.bf16.mxu0 0
    %2480 = vmatpush1.bf16.msra.mxu0 %v2464
    %2481 = vmatprep.subr.bf16.mxu0 0
    %2482 = vmatpush1.bf16.msra.mxu0 %v2463
    %2483 = vmatprep.subr.bf16.mxu0 0
    %2484 = vmatpush1.bf16.msra.mxu0 %v2462
    %2485 = vmatprep.subr.bf16.mxu0 0
    %2486 = vmatpush1.bf16.msra.mxu0 %v2461
    %2487 = vmatprep.subr.bf16.mxu0 0
    %2488 = vmatpush1.bf16.msra.mxu0 %v2460
    %2489 = vmatprep.subr.bf16.mxu0 0
    %2490 = vmatpush1.bf16.msra.mxu0 %v2459
    %2491 = vmatprep.subr.bf16.mxu0 0
    %2492 = vmatpush2.bf16.msra.mxu0 0
    %2493 = vmatprep.subr.bf16.mxu0 0
    %2494 = vmatpush2.bf16.msra.mxu0 0
    %2495 = vmatprep.subr.bf16.mxu0 0
    %2496 = vmatpush2.bf16.msra.mxu0 0
    %2497 = vmatprep.subr.bf16.mxu0 0
    %2498 = vmatpush2.bf16.msra.mxu0 0
    %2499 = vmatprep.subr.bf16.mxu0 0
    %2500 = vmatpush2.bf16.msra.mxu0 0
    %2501 = vmatprep.subr.bf16.mxu0 0
    %2502 = vmatpush2.bf16.msra.mxu0 0
    %2503 = vmatprep.subr.bf16.mxu0 0
    %2504 = vmatpush2.bf16.msra.mxu0 0
    %2505 = vmatprep.subr.bf16.mxu0 0
    %2506 = vmatpush2.bf16.msra.mxu0 0
    %2507 = vmatprep.mubr.bf16.mxu0 0
    %2508 = vmatmul.mubr.bf16.gmra.mxu0 %v2425
    %v2509 = vpop.f32.mrf.mxu0
    %v2510 = vadd.f32 0.0, %v2509
    %v2511 = vpop.f32.mrf.mxu0
    %v2512 = vpop.f32.mrf.mxu0
    %v2513 = vpop.f32.mrf.mxu0
    %2514 = vdwg.mxu0
    %v2531 = vunpack.c.l.b16 %v2392
    %v2532 = vunpack.c.l.b16 %v2393
    %v2533 = vunpack.c.l.b16 %v2394
    %v2534 = vunpack.c.l.b16 %v2395
    %v2535 = vunpack.c.l.b16 %v2396
    %v2536 = vunpack.c.l.b16 %v2397
    %v2537 = vunpack.c.l.b16 %v2398
    %v2538 = vunpack.c.l.b16 %v2399
    %v2539 = vunpack.c.l.b16 %v2400
    %v2540 = vunpack.c.l.b16 %v2401
    %v2541 = vunpack.c.l.b16 %v2402
    %v2542 = vunpack.c.l.b16 %v2403
    %v2543 = vunpack.c.l.b16 %v2404
    %v2544 = vunpack.c.l.b16 %v2405
    %v2545 = vunpack.c.l.b16 %v2406
    %v2546 = vunpack.c.l.b16 %v2407
    %v2547 = vpack.c.b16 %v2532, %v2531
    %v2548 = vpack.c.b16 %v2534, %v2533
    %v2549 = vpack.c.b16 %v2536, %v2535
    %v2550 = vpack.c.b16 %v2538, %v2537
    %v2551 = vpack.c.b16 %v2540, %v2539
    %v2552 = vpack.c.b16 %v2542, %v2541
    %v2553 = vpack.c.b16 %v2544, %v2543
    %v2554 = vpack.c.b16 %v2546, %v2545
    %2563 = vmatprep.subr.bf16.mxu0 0
    %2564 = vmatpush1.bf16.msra.mxu0 %v2554
    %2565 = vmatprep.subr.bf16.mxu0 0
    %2566 = vmatpush1.bf16.msra.mxu0 %v2553
    %2567 = vmatprep.subr.bf16.mxu0 0
    %2568 = vmatpush1.bf16.msra.mxu0 %v2552
    %2569 = vmatprep.subr.bf16.mxu0 0
    %2570 = vmatpush1.bf16.msra.mxu0 %v2551
    %2571 = vmatprep.subr.bf16.mxu0 0
    %2572 = vmatpush1.bf16.msra.mxu0 %v2550
    %2573 = vmatprep.subr.bf16.mxu0 0
    %2574 = vmatpush1.bf16.msra.mxu0 %v2549
    %2575 = vmatprep.subr.bf16.mxu0 0
    %2576 = vmatpush1.bf16.msra.mxu0 %v2548
    %2577 = vmatprep.subr.bf16.mxu0 0
    %2578 = vmatpush1.bf16.msra.mxu0 %v2547
    %2579 = vmatprep.subr.bf16.mxu0 0
    %2580 = vmatpush2.bf16.msra.mxu0 0
    %2581 = vmatprep.subr.bf16.mxu0 0
    %2582 = vmatpush2.bf16.msra.mxu0 0
    %2583 = vmatprep.subr.bf16.mxu0 0
    %2584 = vmatpush2.bf16.msra.mxu0 0
    %2585 = vmatprep.subr.bf16.mxu0 0
    %2586 = vmatpush2.bf16.msra.mxu0 0
    %2587 = vmatprep.subr.bf16.mxu0 0
    %2588 = vmatpush2.bf16.msra.mxu0 0
    %2589 = vmatprep.subr.bf16.mxu0 0
    %2590 = vmatpush2.bf16.msra.mxu0 0
    %2591 = vmatprep.subr.bf16.mxu0 0
    %2592 = vmatpush2.bf16.msra.mxu0 0
    %2593 = vmatprep.subr.bf16.mxu0 0
    %2594 = vmatpush2.bf16.msra.mxu0 0
    %2595 = vmatprep.mubr.bf16.mxu0 0
    %2596 = vmatmul.mubr.bf16.gmra.mxu0 %v2389
    %v2597 = vpop.f32.mrf.mxu0
    %v2598 = vadd.f32 %v2510, %v2597
    %v2599 = vpop.f32.mrf.mxu0
    %v2600 = vpop.f32.mrf.mxu0
    %v2601 = vpop.f32.mrf.mxu0
    %2602 = vdwg.mxu0
    %v2603 = vld [vmem:[%s3 + $0x80] sm:$0xf]
    %v2604 = vld [vmem:[%s3 + $0x84] sm:$0xf]
    %v2605 = vld [vmem:[%s3 + $0x88] sm:$0xf]
    %v2606 = vld [vmem:[%s3 + $0x8c] sm:$0xf]
    %v2607 = vld [vmem:[%s3 + $0x90] sm:$0xf]
    %v2608 = vld [vmem:[%s3 + $0x94] sm:$0xf]
    %v2609 = vld [vmem:[%s3 + $0x98] sm:$0xf]
    %v2610 = vld [vmem:[%s3 + $0x9c] sm:$0xf]
    %v2611 = vld [vmem:[%s3 + $0xa0] sm:$0xf]
    %v2612 = vld [vmem:[%s3 + $0xa4] sm:$0xf]
    %v2613 = vld [vmem:[%s3 + $0xa8] sm:$0xf]
    %v2614 = vld [vmem:[%s3 + $0xac] sm:$0xf]
    %v2615 = vld [vmem:[%s3 + $0xb0] sm:$0xf]
    %v2616 = vld [vmem:[%s3 + $0xb4] sm:$0xf]
    %v2617 = vld [vmem:[%s3 + $0xb8] sm:$0xf]
    %v2618 = vld [vmem:[%s3 + $0xbc] sm:$0xf]
    %v2635 = vunpack.c.l.b16 %v2603
    %v2636 = vunpack.c.l.b16 %v2604
    %v2637 = vunpack.c.l.b16 %v2605
    %v2638 = vunpack.c.l.b16 %v2606
    %v2639 = vunpack.c.l.b16 %v2607
    %v2640 = vunpack.c.l.b16 %v2608
    %v2641 = vunpack.c.l.b16 %v2609
    %v2642 = vunpack.c.l.b16 %v2610
    %v2643 = vunpack.c.l.b16 %v2611
    %v2644 = vunpack.c.l.b16 %v2612
    %v2645 = vunpack.c.l.b16 %v2613
    %v2646 = vunpack.c.l.b16 %v2614
    %v2647 = vunpack.c.l.b16 %v2615
    %v2648 = vunpack.c.l.b16 %v2616
    %v2649 = vunpack.c.l.b16 %v2617
    %v2650 = vunpack.c.l.b16 %v2618
    %v2651 = vpack.c.b16 %v2636, %v2635
    %v2652 = vpack.c.b16 %v2638, %v2637
    %v2653 = vpack.c.b16 %v2640, %v2639
    %v2654 = vpack.c.b16 %v2642, %v2641
    %v2655 = vpack.c.b16 %v2644, %v2643
    %v2656 = vpack.c.b16 %v2646, %v2645
    %v2657 = vpack.c.b16 %v2648, %v2647
    %v2658 = vpack.c.b16 %v2650, %v2649
    %2667 = vmatprep.subr.bf16.mxu0 0
    %2668 = vmatpush1.bf16.msra.mxu0 %v2658
    %2669 = vmatprep.subr.bf16.mxu0 0
    %2670 = vmatpush1.bf16.msra.mxu0 %v2657
    %2671 = vmatprep.subr.bf16.mxu0 0
    %2672 = vmatpush1.bf16.msra.mxu0 %v2656
    %2673 = vmatprep.subr.bf16.mxu0 0
    %2674 = vmatpush1.bf16.msra.mxu0 %v2655
    %2675 = vmatprep.subr.bf16.mxu0 0
    %2676 = vmatpush1.bf16.msra.mxu0 %v2654
    %2677 = vmatprep.subr.bf16.mxu0 0
    %2678 = vmatpush1.bf16.msra.mxu0 %v2653
    %2679 = vmatprep.subr.bf16.mxu0 0
    %2680 = vmatpush1.bf16.msra.mxu0 %v2652
    %2681 = vmatprep.subr.bf16.mxu0 0
    %2682 = vmatpush1.bf16.msra.mxu0 %v2651
    %2683 = vmatprep.subr.bf16.mxu0 0
    %2684 = vmatpush2.bf16.msra.mxu0 0
    %2685 = vmatprep.subr.bf16.mxu0 0
    %2686 = vmatpush2.bf16.msra.mxu0 0
    %2687 = vmatprep.subr.bf16.mxu0 0
    %2688 = vmatpush2.bf16.msra.mxu0 0
    %2689 = vmatprep.subr.bf16.mxu0 0
    %2690 = vmatpush2.bf16.msra.mxu0 0
    %2691 = vmatprep.subr.bf16.mxu0 0
    %2692 = vmatpush2.bf16.msra.mxu0 0
    %2693 = vmatprep.subr.bf16.mxu0 0
    %2694 = vmatpush2.bf16.msra.mxu0 0
    %2695 = vmatprep.subr.bf16.mxu0 0
    %2696 = vmatpush2.bf16.msra.mxu0 0
    %2697 = vmatprep.subr.bf16.mxu0 0
    %2698 = vmatpush2.bf16.msra.mxu0 0
    %2699 = vmatprep.mubr.bf16.mxu0 0
    %2700 = vmatmul.mubr.bf16.gmra.mxu0 %v2390
    %v2701 = vpop.f32.mrf.mxu0
    %v2702 = vadd.f32 0.0, %v2701
    %v2703 = vpop.f32.mrf.mxu0
    %v2704 = vpop.f32.mrf.mxu0
    %v2705 = vpop.f32.mrf.mxu0
    %2706 = vdwg.mxu0
    %v2707 = vadd.f32 %v2598, %v2702
    %v2708 = vld [vmem:[%s3 + $0xc0] sm:$0xf]
    %v2709 = vld [vmem:[%s3 + $0xc4] sm:$0xf]
    %v2710 = vld [vmem:[%s3 + $0xc8] sm:$0xf]
    %v2711 = vld [vmem:[%s3 + $0xcc] sm:$0xf]
    %v2712 = vld [vmem:[%s3 + $0xd0] sm:$0xf]
    %v2713 = vld [vmem:[%s3 + $0xd4] sm:$0xf]
    %v2714 = vld [vmem:[%s3 + $0xd8] sm:$0xf]
    %v2715 = vld [vmem:[%s3 + $0xdc] sm:$0xf]
    %v2716 = vld [vmem:[%s3 + $0xe0] sm:$0xf]
    %v2717 = vld [vmem:[%s3 + $0xe4] sm:$0xf]
    %v2718 = vld [vmem:[%s3 + $0xe8] sm:$0xf]
    %v2719 = vld [vmem:[%s3 + $0xec] sm:$0xf]
    %v2720 = vld [vmem:[%s3 + $0xf0] sm:$0xf]
    %v2721 = vld [vmem:[%s3 + $0xf4] sm:$0xf]
    %v2722 = vld [vmem:[%s3 + $0xf8] sm:$0xf]
    %v2723 = vld [vmem:[%s3 + $0xfc] sm:$0xf]
    %v2725 = vrot.slane %v2390, 4
    %v2743 = vunpack.c.l.b16 %v2708
    %v2744 = vunpack.c.l.b16 %v2709
    %v2745 = vunpack.c.l.b16 %v2710
    %v2746 = vunpack.c.l.b16 %v2711
    %v2747 = vunpack.c.l.b16 %v2712
    %v2748 = vunpack.c.l.b16 %v2713
    %v2749 = vunpack.c.l.b16 %v2714
    %v2750 = vunpack.c.l.b16 %v2715
    %v2751 = vunpack.c.l.b16 %v2716
    %v2752 = vunpack.c.l.b16 %v2717
    %v2753 = vunpack.c.l.b16 %v2718
    %v2754 = vunpack.c.l.b16 %v2719
    %v2755 = vunpack.c.l.b16 %v2720
    %v2756 = vunpack.c.l.b16 %v2721
    %v2757 = vunpack.c.l.b16 %v2722
    %v2758 = vunpack.c.l.b16 %v2723
    %v2759 = vpack.c.b16 %v2744, %v2743
    %v2760 = vpack.c.b16 %v2746, %v2745
    %v2761 = vpack.c.b16 %v2748, %v2747
    %v2762 = vpack.c.b16 %v2750, %v2749
    %v2763 = vpack.c.b16 %v2752, %v2751
    %v2764 = vpack.c.b16 %v2754, %v2753
    %v2765 = vpack.c.b16 %v2756, %v2755
    %v2766 = vpack.c.b16 %v2758, %v2757
    %2775 = vmatprep.subr.bf16.mxu0 0
    %2776 = vmatpush1.bf16.msra.mxu0 %v2766
    %2777 = vmatprep.subr.bf16.mxu0 0
    %2778 = vmatpush1.bf16.msra.mxu0 %v2765
    %2779 = vmatprep.subr.bf16.mxu0 0
    %2780 = vmatpush1.bf16.msra.mxu0 %v2764
    %2781 = vmatprep.subr.bf16.mxu0 0
    %2782 = vmatpush1.bf16.msra.mxu0 %v2763
    %2783 = vmatprep.subr.bf16.mxu0 0
    %2784 = vmatpush1.bf16.msra.mxu0 %v2762
    %2785 = vmatprep.subr.bf16.mxu0 0
    %2786 = vmatpush1.bf16.msra.mxu0 %v2761
    %2787 = vmatprep.subr.bf16.mxu0 0
    %2788 = vmatpush1.bf16.msra.mxu0 %v2760
    %2789 = vmatprep.subr.bf16.mxu0 0
    %2790 = vmatpush1.bf16.msra.mxu0 %v2759
    %2791 = vmatprep.subr.bf16.mxu0 0
    %2792 = vmatpush2.bf16.msra.mxu0 0
    %2793 = vmatprep.subr.bf16.mxu0 0
    %2794 = vmatpush2.bf16.msra.mxu0 0
    %2795 = vmatprep.subr.bf16.mxu0 0
    %2796 = vmatpush2.bf16.msra.mxu0 0
    %2797 = vmatprep.subr.bf16.mxu0 0
    %2798 = vmatpush2.bf16.msra.mxu0 0
    %2799 = vmatprep.subr.bf16.mxu0 0
    %2800 = vmatpush2.bf16.msra.mxu0 0
    %2801 = vmatprep.subr.bf16.mxu0 0
    %2802 = vmatpush2.bf16.msra.mxu0 0
    %2803 = vmatprep.subr.bf16.mxu0 0
    %2804 = vmatpush2.bf16.msra.mxu0 0
    %2805 = vmatprep.subr.bf16.mxu0 0
    %2806 = vmatpush2.bf16.msra.mxu0 0
    %2807 = vmatprep.mubr.bf16.mxu0 0
    %2808 = vmatmul.mubr.bf16.gmra.mxu0 %v2725
    %v2809 = vpop.f32.mrf.mxu0
    %v2810 = vadd.f32 0.0, %v2809
    %v2811 = vpop.f32.mrf.mxu0
    %v2812 = vpop.f32.mrf.mxu0
    %v2813 = vpop.f32.mrf.mxu0
    %2814 = vdwg.mxu0
    %v2815 = vadd.f32 %v2707, %v2810
    %v2816 = vld [vmem:[%s3 + $0x100] sm:$0xf]
    %v2817 = vld [vmem:[%s3 + $0x104] sm:$0xf]
    %v2818 = vld [vmem:[%s3 + $0x108] sm:$0xf]
    %v2819 = vld [vmem:[%s3 + $0x10c] sm:$0xf]
    %v2820 = vld [vmem:[%s3 + $0x110] sm:$0xf]
    %v2821 = vld [vmem:[%s3 + $0x114] sm:$0xf]
    %v2822 = vld [vmem:[%s3 + $0x118] sm:$0xf]
    %v2823 = vld [vmem:[%s3 + $0x11c] sm:$0xf]
    %v2824 = vld [vmem:[%s3 + $0x120] sm:$0xf]
    %v2825 = vld [vmem:[%s3 + $0x124] sm:$0xf]
    %v2826 = vld [vmem:[%s3 + $0x128] sm:$0xf]
    %v2827 = vld [vmem:[%s3 + $0x12c] sm:$0xf]
    %v2828 = vld [vmem:[%s3 + $0x130] sm:$0xf]
    %v2829 = vld [vmem:[%s3 + $0x134] sm:$0xf]
    %v2830 = vld [vmem:[%s3 + $0x138] sm:$0xf]
    %v2831 = vld [vmem:[%s3 + $0x13c] sm:$0xf]
    %v2848 = vunpack.c.l.b16 %v2816
    %v2849 = vunpack.c.l.b16 %v2817
    %v2850 = vunpack.c.l.b16 %v2818
    %v2851 = vunpack.c.l.b16 %v2819
    %v2852 = vunpack.c.l.b16 %v2820
    %v2853 = vunpack.c.l.b16 %v2821
    %v2854 = vunpack.c.l.b16 %v2822
    %v2855 = vunpack.c.l.b16 %v2823
    %v2856 = vunpack.c.l.b16 %v2824
    %v2857 = vunpack.c.l.b16 %v2825
    %v2858 = vunpack.c.l.b16 %v2826
    %v2859 = vunpack.c.l.b16 %v2827
    %v2860 = vunpack.c.l.b16 %v2828
    %v2861 = vunpack.c.l.b16 %v2829
    %v2862 = vunpack.c.l.b16 %v2830
    %v2863 = vunpack.c.l.b16 %v2831
    %v2864 = vpack.c.b16 %v2849, %v2848
    %v2865 = vpack.c.b16 %v2851, %v2850
    %v2866 = vpack.c.b16 %v2853, %v2852
    %v2867 = vpack.c.b16 %v2855, %v2854
    %v2868 = vpack.c.b16 %v2857, %v2856
    %v2869 = vpack.c.b16 %v2859, %v2858
    %v2870 = vpack.c.b16 %v2861, %v2860
    %v2871 = vpack.c.b16 %v2863, %v2862
    %2880 = vmatprep.subr.bf16.mxu0 0
    %2881 = vmatpush1.bf16.msra.mxu0 %v2871
    %2882 = vmatprep.subr.bf16.mxu0 0
    %2883 = vmatpush1.bf16.msra.mxu0 %v2870
    %2884 = vmatprep.subr.bf16.mxu0 0
    %2885 = vmatpush1.bf16.msra.mxu0 %v2869
    %2886 = vmatprep.subr.bf16.mxu0 0
    %2887 = vmatpush1.bf16.msra.mxu0 %v2868
    %2888 = vmatprep.subr.bf16.mxu0 0
    %2889 = vmatpush1.bf16.msra.mxu0 %v2867
    %2890 = vmatprep.subr.bf16.mxu0 0
    %2891 = vmatpush1.bf16.msra.mxu0 %v2866
    %2892 = vmatprep.subr.bf16.mxu0 0
    %2893 = vmatpush1.bf16.msra.mxu0 %v2865
    %2894 = vmatprep.subr.bf16.mxu0 0
    %2895 = vmatpush1.bf16.msra.mxu0 %v2864
    %2896 = vmatprep.subr.bf16.mxu0 0
    %2897 = vmatpush2.bf16.msra.mxu0 0
    %2898 = vmatprep.subr.bf16.mxu0 0
    %2899 = vmatpush2.bf16.msra.mxu0 0
    %2900 = vmatprep.subr.bf16.mxu0 0
    %2901 = vmatpush2.bf16.msra.mxu0 0
    %2902 = vmatprep.subr.bf16.mxu0 0
    %2903 = vmatpush2.bf16.msra.mxu0 0
    %2904 = vmatprep.subr.bf16.mxu0 0
    %2905 = vmatpush2.bf16.msra.mxu0 0
    %2906 = vmatprep.subr.bf16.mxu0 0
    %2907 = vmatpush2.bf16.msra.mxu0 0
    %2908 = vmatprep.subr.bf16.mxu0 0
    %2909 = vmatpush2.bf16.msra.mxu0 0
    %2910 = vmatprep.subr.bf16.mxu0 0
    %2911 = vmatpush2.bf16.msra.mxu0 0
    %2912 = vmatprep.mubr.bf16.mxu0 0
    %2913 = vmatmul.mubr.bf16.gmra.mxu0 %v2391
    %v2914 = vpop.f32.mrf.mxu0
    %v2915 = vadd.f32 0.0, %v2914
    %v2916 = vpop.f32.mrf.mxu0
    %v2917 = vpop.f32.mrf.mxu0
    %v2918 = vpop.f32.mrf.mxu0
    %2919 = vdwg.mxu0
    %v2920 = vadd.f32 %v2815, %v2915
    %v2921 = vld [vmem:[%s6 + $0x2] sm:$0x1]
    %v2922 = vlaneseq
    %v2923 = vshrl.u32 %v2922, 7
    %v2924 = vsub.s32 0, %v2923
    %v2925 = vrot.slane %v2921, %v2924
    %v2926 = vadd.f32 %v2920, %v2925
    %v2927 = vmax.f32 %v2926, 0.0
    %v2928 = vpack.c.bf16 %v2927, %v2927
    %v2929 = vld [vmem:[%s4] sm:$0xf]
    %v2930 = vld [vmem:[%s4 + $0x4] sm:$0xf]
    %v2931 = vld [vmem:[%s4 + $0x8] sm:$0xf]
    %v2932 = vld [vmem:[%s4 + $0xc] sm:$0xf]
    %v2933 = vld [vmem:[%s4 + $0x10] sm:$0xf]
    %v2934 = vld [vmem:[%s4 + $0x14] sm:$0xf]
    %v2935 = vld [vmem:[%s4 + $0x18] sm:$0xf]
    %v2936 = vld [vmem:[%s4 + $0x1c] sm:$0xf]
    %v2937 = vld [vmem:[%s4 + $0x20] sm:$0xf]
    %v2938 = vld [vmem:[%s4 + $0x24] sm:$0xf]
    %v2939 = vld [vmem:[%s4 + $0x28] sm:$0xf]
    %v2940 = vld [vmem:[%s4 + $0x2c] sm:$0xf]
    %v2941 = vld [vmem:[%s4 + $0x30] sm:$0xf]
    %v2942 = vld [vmem:[%s4 + $0x34] sm:$0xf]
    %v2943 = vld [vmem:[%s4 + $0x38] sm:$0xf]
    %v2944 = vld [vmem:[%s4 + $0x3c] sm:$0xf]
    %v2945 = vld [vmem:[%s6 + $0x3] sm:$0x1]
    %v2946 = vlaneseq
    %v2947 = vshrl.u32 %v2946, 7
    %v2948 = vsub.s32 0, %v2947
    %v2949 = vrot.slane %v2945, %v2948
    %v2966 = vunpack.c.l.b16 %v2929
    %v2967 = vunpack.c.l.b16 %v2930
    %v2968 = vunpack.c.l.b16 %v2931
    %v2969 = vunpack.c.l.b16 %v2932
    %v2970 = vunpack.c.l.b16 %v2933
    %v2971 = vunpack.c.l.b16 %v2934
    %v2972 = vunpack.c.l.b16 %v2935
    %v2973 = vunpack.c.l.b16 %v2936
    %v2974 = vunpack.c.l.b16 %v2937
    %v2975 = vunpack.c.l.b16 %v2938
    %v2976 = vunpack.c.l.b16 %v2939
    %v2977 = vunpack.c.l.b16 %v2940
    %v2978 = vunpack.c.l.b16 %v2941
    %v2979 = vunpack.c.l.b16 %v2942
    %v2980 = vunpack.c.l.b16 %v2943
    %v2981 = vunpack.c.l.b16 %v2944
    %v2982 = vpack.c.b16 %v2967, %v2966
    %v2983 = vpack.c.b16 %v2969, %v2968
    %v2984 = vpack.c.b16 %v2971, %v2970
    %v2985 = vpack.c.b16 %v2973, %v2972
    %v2986 = vpack.c.b16 %v2975, %v2974
    %v2987 = vpack.c.b16 %v2977, %v2976
    %v2988 = vpack.c.b16 %v2979, %v2978
    %v2989 = vpack.c.b16 %v2981, %v2980
    %2998 = vmatprep.subr.bf16.mxu0 0
    %2999 = vmatpush1.bf16.msra.mxu0 %v2989
    %3000 = vmatprep.subr.bf16.mxu0 0
    %3001 = vmatpush1.bf16.msra.mxu0 %v2988
    %3002 = vmatprep.subr.bf16.mxu0 0
    %3003 = vmatpush1.bf16.msra.mxu0 %v2987
    %3004 = vmatprep.subr.bf16.mxu0 0
    %3005 = vmatpush1.bf16.msra.mxu0 %v2986
    %3006 = vmatprep.subr.bf16.mxu0 0
    %3007 = vmatpush1.bf16.msra.mxu0 %v2985
    %3008 = vmatprep.subr.bf16.mxu0 0
    %3009 = vmatpush1.bf16.msra.mxu0 %v2984
    %3010 = vmatprep.subr.bf16.mxu0 0
    %3011 = vmatpush1.bf16.msra.mxu0 %v2983
    %3012 = vmatprep.subr.bf16.mxu0 0
    %3013 = vmatpush1.bf16.msra.mxu0 %v2982
    %3014 = vmatprep.subr.bf16.mxu0 0
    %3015 = vmatpush2.bf16.msra.mxu0 0
    %3016 = vmatprep.subr.bf16.mxu0 0
    %3017 = vmatpush2.bf16.msra.mxu0 0
    %3018 = vmatprep.subr.bf16.mxu0 0
    %3019 = vmatpush2.bf16.msra.mxu0 0
    %3020 = vmatprep.subr.bf16.mxu0 0
    %3021 = vmatpush2.bf16.msra.mxu0 0
    %3022 = vmatprep.subr.bf16.mxu0 0
    %3023 = vmatpush2.bf16.msra.mxu0 0
    %3024 = vmatprep.subr.bf16.mxu0 0
    %3025 = vmatpush2.bf16.msra.mxu0 0
    %3026 = vmatprep.subr.bf16.mxu0 0
    %3027 = vmatpush2.bf16.msra.mxu0 0
    %3028 = vmatprep.subr.bf16.mxu0 0
    %3029 = vmatpush2.bf16.msra.mxu0 0
    %3030 = vmatprep.mubr.bf16.mxu0 0
    %3031 = vmatmul.mubr.bf16.gmra.mxu0 %v2928
    %v3032 = vpop.f32.mrf.mxu0
    %v3033 = vadd.f32 %v2949, %v3032
    %v3034 = vpop.f32.mrf.mxu0
    %v3035 = vpop.f32.mrf.mxu0
    %v3036 = vpop.f32.mrf.mxu0
    %3037 = vdwg.mxu0
    %v3038 = vmax.f32 %v3033, 0.0
    %v3039 = vpack.c.bf16 %v3038, %v3038
    %v3040 = vld [vmem:[%s5] sm:$0xf]
    %v3041 = vld [vmem:[%s5 + $0x4] sm:$0xf]
    %v3042 = vld [vmem:[%s5 + $0x8] sm:$0xf]
    %v3043 = vld [vmem:[%s5 + $0xc] sm:$0xf]
    %v3044 = vld [vmem:[%s5 + $0x10] sm:$0xf]
    %v3045 = vld [vmem:[%s5 + $0x14] sm:$0xf]
    %v3046 = vld [vmem:[%s5 + $0x18] sm:$0xf]
    %v3047 = vld [vmem:[%s5 + $0x1c] sm:$0xf]
    %v3048 = vld [vmem:[%s5 + $0x20] sm:$0xf]
    %v3049 = vld [vmem:[%s5 + $0x24] sm:$0xf]
    %v3050 = vld [vmem:[%s5 + $0x28] sm:$0xf]
    %v3051 = vld [vmem:[%s5 + $0x2c] sm:$0xf]
    %v3052 = vld [vmem:[%s5 + $0x30] sm:$0xf]
    %v3053 = vld [vmem:[%s5 + $0x34] sm:$0xf]
    %v3054 = vld [vmem:[%s5 + $0x38] sm:$0xf]
    %v3055 = vld [vmem:[%s5 + $0x3c] sm:$0xf]
    %v3056 = vld [vmem:[%s6 + $0x4] sm:$0x1]
    %v3057 = vlaneseq
    %v3058 = vshrl.u32 %v3057, 7
    %v3059 = vsub.s32 0, %v3058
    %v3060 = vrot.slane %v3056, %v3059
    %v3077 = vunpack.c.l.b16 %v3040
    %v3078 = vunpack.c.l.b16 %v3041
    %v3079 = vunpack.c.l.b16 %v3042
    %v3080 = vunpack.c.l.b16 %v3043
    %v3081 = vunpack.c.l.b16 %v3044
    %v3082 = vunpack.c.l.b16 %v3045
    %v3083 = vunpack.c.l.b16 %v3046
    %v3084 = vunpack.c.l.b16 %v3047
    %v3085 = vunpack.c.l.b16 %v3048
    %v3086 = vunpack.c.l.b16 %v3049
    %v3087 = vunpack.c.l.b16 %v3050
    %v3088 = vunpack.c.l.b16 %v3051
    %v3089 = vunpack.c.l.b16 %v3052
    %v3090 = vunpack.c.l.b16 %v3053
    %v3091 = vunpack.c.l.b16 %v3054
    %v3092 = vunpack.c.l.b16 %v3055
    %v3093 = vpack.c.b16 %v3078, %v3077
    %v3094 = vpack.c.b16 %v3080, %v3079
    %v3095 = vpack.c.b16 %v3082, %v3081
    %v3096 = vpack.c.b16 %v3084, %v3083
    %v3097 = vpack.c.b16 %v3086, %v3085
    %v3098 = vpack.c.b16 %v3088, %v3087
    %v3099 = vpack.c.b16 %v3090, %v3089
    %v3100 = vpack.c.b16 %v3092, %v3091
    %3109 = vmatprep.subr.bf16.mxu0 0
    %3110 = vmatpush1.bf16.msra.mxu0 %v3100
    %3111 = vmatprep.subr.bf16.mxu0 0
    %3112 = vmatpush1.bf16.msra.mxu0 %v3099
    %3113 = vmatprep.subr.bf16.mxu0 0
    %3114 = vmatpush1.bf16.msra.mxu0 %v3098
    %3115 = vmatprep.subr.bf16.mxu0 0
    %3116 = vmatpush1.bf16.msra.mxu0 %v3097
    %3117 = vmatprep.subr.bf16.mxu0 0
    %3118 = vmatpush1.bf16.msra.mxu0 %v3096
    %3119 = vmatprep.subr.bf16.mxu0 0
    %3120 = vmatpush1.bf16.msra.mxu0 %v3095
    %3121 = vmatprep.subr.bf16.mxu0 0
    %3122 = vmatpush1.bf16.msra.mxu0 %v3094
    %3123 = vmatprep.subr.bf16.mxu0 0
    %3124 = vmatpush1.bf16.msra.mxu0 %v3093
    %3125 = vmatprep.subr.bf16.mxu0 0
    %3126 = vmatpush2.bf16.msra.mxu0 0
    %3127 = vmatprep.subr.bf16.mxu0 0
    %3128 = vmatpush2.bf16.msra.mxu0 0
    %3129 = vmatprep.subr.bf16.mxu0 0
    %3130 = vmatpush2.bf16.msra.mxu0 0
    %3131 = vmatprep.subr.bf16.mxu0 0
    %3132 = vmatpush2.bf16.msra.mxu0 0
    %3133 = vmatprep.subr.bf16.mxu0 0
    %3134 = vmatpush2.bf16.msra.mxu0 0
    %3135 = vmatprep.subr.bf16.mxu0 0
    %3136 = vmatpush2.bf16.msra.mxu0 0
    %3137 = vmatprep.subr.bf16.mxu0 0
    %3138 = vmatpush2.bf16.msra.mxu0 0
    %3139 = vmatprep.subr.bf16.mxu0 0
    %3140 = vmatpush2.bf16.msra.mxu0 0
    %3141 = vmatprep.mubr.bf16.mxu0 0
    %3142 = vmatmul.mubr.bf16.gmra.mxu0 %v3039
    %v3143 = vpop.f32.mrf.mxu0
    %v3144 = vadd.f32 %v3060, %v3143
    %v3145 = vpop.f32.mrf.mxu0
    %v3146 = vpop.f32.mrf.mxu0
    %v3147 = vpop.f32.mrf.mxu0
    %3148 = vdwg.mxu0
    %3149 = vst [vmem:[#allocation2] sm:$0xff] %v3144
    // Predicated region
    $region30: #{model4_forward.1} parent=1 // pred_check
      _
    $region31: #{model4_forward.1} parent=1 // pred_check_branch
      %3151 = sbr.rel (0) target = $region33
    $region32: #{model4_forward.1} parent=1 // pred_region
      %s3153 = ssub.s32 128, 128
      %3154 = vsyncadd [#allocation3], %s3153
      %s3156 = sshll.u32 [#allocation2], 4
      %s3157 = int_to_ptr.vmem [resolvable:$true] %s3156
      %3159 = dma.vmem_to_hbm [thread:$0]  %s3157, 128, %s7, [#allocation3]
    $region33: #{model4_forward.1} parent=1 // pred_fallthru
      _
    // Predicated region
    $region34: #{model4_forward.1} parent=1 // pred_check
      _
    $region35: #{model4_forward.1} parent=1 // pred_check_branch
      %3161 = sbr.rel (0) target = $region37
    $region36: #{model4_forward.1} parent=1 // pred_region
      %3162 = dma.done [#allocation3], 128
    $region37: #{model4_forward.1} parent=1 // pred_fallthru
      _
    %3163 = vsyncpa [#allocation3], 1

</llo_original>
